<compile_context>
chip_gen: v6e
topology: v6e:2x2x1
jax: 0.10.0
libtpu: 0.0.40
codegen_flags: <defaults>
</compile_context>

<pallas_src>
import numpy as np
import jax
import jax.numpy as jnp
from jax.experimental import pallas as pl
from jax.experimental.pallas import tpu as pltpu

START_TAG = "<START>"
STOP_TAG = "<STOP>"


def make_bilstm_crf_kernel(T, H2, K, KP, start_idx):
    """Build the Pallas kernel for fixed static sizes.

    Packed layouts (all f32):
      embcat : (T, 2E)        row t = [embeds[t] | embeds[T-1-t]]
      w_in   : (2E, 8*H2)     block matrix -> packed gates
      w_hh   : (2*H2, 8*H2)
      wtag   : (2*H2, KP)     hidden2tag weights, tag dim zero-padded to KP
      transT : (K, K)         transitions.T  -> indexed [prev, next]
      smalls : (4, >=8*H2)    row0 = [h0_fwd|h0_bwd|c0_fwd|c0_bwd], row1 =
                              transitions[STOP, :], row2 = packed LSTM bias,
                              row3 = hidden2tag bias (KP-padded)
      gates  : (1, 8*H2)      [i_f,i_b, f_f,f_b, g_f,g_b, o_f,o_b]
      state  : (1, 2*H2)      [fwd | bwd]
    Outputs:
      feats  : (T, KP)        lstm features (lane-dense, zero pad lanes >= K)
      out    : (1, KP)        lanes [0,T) = path, lane T = score,
                              lane T+1 = tag before t=0 (must be START)
    """

    def kernel(embcat_ref, win_ref, whh_ref, wtag_ref, transT_ref, smalls_ref,
               feats_ref, out_ref):
        f32 = jnp.float32
        smalls = smalls_ref[...]
        h = smalls[0:1, 0:2 * H2]                       # (1, 2*H2) [fwd | bwd]
        c = smalls[0:1, 2 * H2:4 * H2]                  # (1, 2*H2)
        trans_stop = smalls[1:2, 0:K]                   # (1, K)
        bias = smalls[2:3, 0:8 * H2]                    # (1, 8*H2)
        btag = smalls[3:4, 0:KP]                        # (1, KP)

        # ---- 1. input projection + bias hoisted out of the recurrence ----
        xproj = jnp.dot(embcat_ref[...], win_ref[...],
                        preferred_element_type=f32) + bias       # (T, 8*H2)

        whh = whh_ref[...]                                        # (2*H2, 8*H2)
        row_ids = jax.lax.broadcasted_iota(jnp.int32, (T, 1), 0)  # (T, 1)

        # ---- 2. fused fwd+bwd recurrence (fully unrolled, T small) ----
        # Hidden rows are accumulated in registers; no per-step masked stores.
        hs_f = jnp.zeros((T, H2), f32)
        hs_b = jnp.zeros((T, H2), f32)
        for s in range(T):
            gates = xproj[s:s + 1, :] + jnp.dot(h, whh,
                                                preferred_element_type=f32)
            sig = jax.nn.sigmoid(gates)                           # one EUP pass
            i_g = sig[:, 0:2 * H2]
            f_g = sig[:, 2 * H2:4 * H2]
            g_g = jnp.tanh(gates[:, 4 * H2:6 * H2])
            o_g = sig[:, 6 * H2:8 * H2]
            c = f_g * c + i_g * g_g
            h = o_g * jnp.tanh(c)
            # fwd hidden belongs to time s, bwd hidden to time T-1-s
            hs_f = hs_f + (row_ids == s).astype(f32) * h[:, 0:H2]
            hs_b = hs_b + (row_ids == (T - 1 - s)).astype(f32) * h[:, H2:2 * H2]

        # ---- 3. hidden -> tag projection (lane-dense, K padded to KP) ----
        wtag = wtag_ref[...]
        feats_full = (jnp.dot(hs_f, wtag[0:H2, :], preferred_element_type=f32)
                      + jnp.dot(hs_b, wtag[H2:2 * H2, :],
                                preferred_element_type=f32)
                      + btag)                                     # (T, KP)
        feats_ref[...] = feats_full

        # ---- 4. Viterbi forward pass (all state + backpointers in vregs) ----
        lane_ids = jax.lax.broadcasted_iota(jnp.int32, (1, K), 1).astype(f32)
        sub_ids = jax.lax.broadcasted_iota(jnp.int32, (K, K), 0).astype(f32)
        eye_k = (jax.lax.broadcasted_iota(jnp.int32, (K, K), 0)
                 == jax.lax.broadcasted_iota(jnp.int32, (K, K), 1)).astype(f32)
        big_k = jnp.float32(K)
        transT = transT_ref[...]                                  # [prev, next]

        fv = jnp.where(lane_ids == jnp.float32(start_idx),
                       jnp.float32(0.0), jnp.float32(-10000.0))   # (1, K)
        bp_rows = []                                              # (1,K) each
        for t in range(T):
            # One lane->sublane flip of fv per step is inherent to the
            # recurrence; implemented as a masked lane-reduce (exact).
            fv_col = jnp.sum(fv * eye_k, axis=1, keepdims=True)   # (K, 1)
            sc = fv_col + transT                                  # sc[prev,next]
            m_row = jnp.max(sc, axis=0, keepdims=True)            # (1, K)
            idx_row = jnp.min(jnp.where(sc == m_row, sub_ids, big_k),
                              axis=0, keepdims=True)              # first argmax
            bp_rows.append(idx_row)
            fv = m_row + feats_full[t:t + 1, 0:K]

        terminal = fv + trans_stop
        best_score = jnp.max(terminal, axis=1, keepdims=True)     # (1, 1)
        last_tag = jnp.min(jnp.where(terminal == best_score, lane_ids, big_k),
                           axis=1, keepdims=True)                 # (1, 1)

        # ---- 5. backtracking in registers; one lane-dense output store ----
        out_lane = jax.lax.broadcasted_iota(jnp.int32, (1, KP), 1)
        acc = jnp.zeros((1, KP), f32)
        cur_oh = (lane_ids == last_tag).astype(f32)               # (1, K)
        for s_ in range(T):
            t = T - 1 - s_
            cur_tag = jnp.sum(cur_oh * lane_ids, axis=1, keepdims=True)  # (1,1)
            acc = acc + (out_lane == t).astype(f32) * cur_tag
            prev = jnp.sum(cur_oh * bp_rows[t], axis=1, keepdims=True)   # (1,1)
            cur_oh = (lane_ids == prev).astype(f32)
        first_prev = jnp.sum(cur_oh * lane_ids, axis=1, keepdims=True)
        acc = (acc + (out_lane == T).astype(f32) * best_score
               + (out_lane == (T + 1)).astype(f32) * first_prev)
        out_ref[...] = acc

    return kernel


def _pack_gate_cols(w_t, H2, is_bwd):
    """(in, 4*H2) with PyTorch gate blocks [i,f,g,o] -> (in, 8*H2) packed
    [i_f,i_b, f_f,f_b, g_f,g_b, o_f,o_b] with zeros in the other direction."""
    in_dim = w_t.shape[0]
    z = jnp.zeros((in_dim, H2), w_t.dtype)
    cols = []
    for gi in range(4):
        blk = w_t[:, gi * H2:(gi + 1) * H2]
        cols.extend([z, blk] if is_bwd else [blk, z])
    return jnp.concatenate(cols, axis=1)


def _pack_bias(bf, bb, H2):
    parts = []
    for gi in range(4):
        parts.append(bf[gi * H2:(gi + 1) * H2])
        parts.append(bb[gi * H2:(gi + 1) * H2])
    return jnp.concatenate(parts).reshape(1, -1)


def init_params(key, vocab_size, E, H, K, start_idx, stop_idx):
    H2 = H // 2
    keys = jax.random.split(key, 12)

    def rn(k, shape, scale=0.1):
        return (scale * jax.random.normal(k, shape)).astype(jnp.float32)

    params = dict(
        embedding=rn(keys[0], (vocab_size, E), 1.0),
        w_ih_f=rn(keys[1], (4 * H2, E)),
        w_hh_f=rn(keys[2], (4 * H2, H2)),
        b_ih_f=rn(keys[3], (4 * H2,)),
        b_hh_f=rn(keys[4], (4 * H2,)),
        w_ih_b=rn(keys[5], (4 * H2, E)),
        w_hh_b=rn(keys[6], (4 * H2, H2)),
        b_ih_b=rn(keys[7], (4 * H2,)),
        b_hh_b=rn(keys[8], (4 * H2,)),
        w_tag=rn(keys[9], (K, H)),
        b_tag=rn(keys[10], (K,)),
        transitions=jax.random.normal(keys[11], (K, K)).astype(jnp.float32),
    )
    trans = params["transitions"]
    trans = trans.at[start_idx, :].set(-10000.0)
    trans = trans.at[:, stop_idx].set(-10000.0)
    params["transitions"] = trans
    return params


def _bilstm_crf_forward(sentence, params, h0, c0, start_idx, stop_idx):
    emb_table = params["embedding"]
    T = int(sentence.shape[0])
    H2 = int(h0.shape[1])
    H = 2 * H2
    K = int(params["transitions"].shape[0])
    KP = 128                                   # lane-dense padded tag width
    assert K <= KP and T + 2 <= KP

    # ----- glue: embedding lookup + packed weight layout prep (plain JAX) -----
    embeds = emb_table[sentence]                                   # (T, E)
    embcat = jnp.concatenate([embeds, embeds[::-1]], axis=1)       # (T, 2E)

    w_in = jnp.concatenate(
        [_pack_gate_cols(params["w_ih_f"].T, H2, False),
         _pack_gate_cols(params["w_ih_b"].T, H2, True)], axis=0)   # (2E, 8H2)
    w_hh = jnp.concatenate(
        [_pack_gate_cols(params["w_hh_f"].T, H2, False),
         _pack_gate_cols(params["w_hh_b"].T, H2, True)], axis=0)   # (2H2, 8H2)
    bias = _pack_bias(params["b_ih_f"] + params["b_hh_f"],
                      params["b_ih_b"] + params["b_hh_b"], H2)     # (1, 8H2)

    wtag_pad = jnp.zeros((H, KP), jnp.float32).at[:, :K].set(params["w_tag"].T)
    transT = params["transitions"].T                               # [prev, next]

    SW = max(8 * H2, KP)
    smalls = jnp.zeros((4, SW), jnp.float32)
    smalls = smalls.at[0, 0:2 * H2].set(h0.reshape(-1))            # [h_f | h_b]
    smalls = smalls.at[0, 2 * H2:4 * H2].set(c0.reshape(-1))       # [c_f | c_b]
    smalls = smalls.at[1, 0:K].set(params["transitions"][stop_idx, :])
    smalls = smalls.at[2, 0:8 * H2].set(bias[0])
    smalls = smalls.at[3, 0:K].set(params["b_tag"])

    kernel = make_bilstm_crf_kernel(T, H2, K, KP, start_idx)
    vmem = pl.BlockSpec(memory_space=pltpu.MemorySpace.VMEM)

    feats_full, packed = pl.pallas_call(
        kernel,
        out_shape=(
            jax.ShapeDtypeStruct((T, KP), jnp.float32),  # lane-dense features
            jax.ShapeDtypeStruct((1, KP), jnp.float32),  # path | score | start
        ),
        in_specs=[vmem] * 6,
        out_specs=(vmem, vmem),
    )(embcat, w_in, w_hh, wtag_pad, transT, smalls)

    feats = feats_full[:, :K]
    path = jnp.rint(packed[0, :T]).astype(jnp.int32)
    score = packed[0, T]
    first_prev = jnp.rint(packed[0, T + 1]).astype(jnp.int32)
    return score, path, first_prev, feats


bilstm_crf_forward = jax.jit(_bilstm_crf_forward, static_argnums=(4, 5))


# ----------------------------- reference (numpy) -----------------------------
def reference_forward(sentence, params, h0, c0, start_idx, stop_idx):
    p = {k: np.asarray(v, np.float32) for k, v in params.items()}
    h0 = np.asarray(h0, np.float32)
    c0 = np.asarray(c0, np.float32)
    emb = p["embedding"][np.asarray(sentence)]
    T = emb.shape[0]
    H2 = h0.shape[1]
    K = p["transitions"].shape[0]

    def sigmoid(x):
        return 1.0 / (1.0 + np.exp(-x))

    def run_dir(w_ih, w_hh, b, h, c, reverse):
        outs = np.zeros((T, H2), np.float32)
        order = range(T - 1, -1, -1) if reverse else range(T)
        for t in order:
            gates = emb[t] @ w_ih.T + h @ w_hh.T + b
            i = sigmoid(gates[0:H2])
            f = sigmoid(gates[H2:2 * H2])
            g = np.tanh(gates[2 * H2:3 * H2])
            o = sigmoid(gates[3 * H2:4 * H2])
            c = f * c + i * g
            h = o * np.tanh(c)
            outs[t] = h
        return outs

    bf = p["b_ih_f"] + p["b_hh_f"]
    bb = p["b_ih_b"] + p["b_hh_b"]
    out_f = run_dir(p["w_ih_f"], p["w_hh_f"], bf, h0[0], c0[0], False)
    out_b = run_dir(p["w_ih_b"], p["w_hh_b"], bb, h0[1], c0[1], True)
    lstm_out = np.concatenate([out_f, out_b], axis=1)
    feats = lstm_out @ p["w_tag"].T + p["b_tag"]

    trans = p["transitions"]
    fv = np.full((K,), -10000.0, np.float32)
    fv[start_idx] = 0.0
    bps = []
    for t in range(T):
        scores = fv[None, :] + trans          # [next, prev]
        best_prev = scores.argmax(axis=1)
        fv = scores.max(axis=1) + feats[t]
        bps.append(best_prev)
    terminal = fv + trans[stop_idx]
    best = int(terminal.argmax())
    path_score = float(terminal[best])
    path = [best]
    for bp in reversed(bps):
        best = int(bp[best])
        path.append(best)
    start = path.pop()
    assert start == start_idx
    path.reverse()
    return path_score, path, feats


if __name__ == "__main__":
    tag_to_ix = {"B": 0, "I": 1, "O": 2, START_TAG: 3, STOP_TAG: 4}
    start_idx = tag_to_ix[START_TAG]
    stop_idx = tag_to_ix[STOP_TAG]
    vocab_size, embedding_dim, hidden_dim, seq_len = 20, 32, 32, 8
    K = len(tag_to_ix)

    key = jax.random.PRNGKey(0)
    k_param, k_h, k_c, k_sent = jax.random.split(key, 4)
    params = init_params(k_param, vocab_size, embedding_dim, hidden_dim, K,
                         start_idx, stop_idx)
    h0 = jax.random.normal(k_h, (2, hidden_dim // 2), jnp.float32)
    c0 = jax.random.normal(k_c, (2, hidden_dim // 2), jnp.float32)
    sentence = jax.random.randint(k_sent, (seq_len,), 0, vocab_size)

    score, path, first_prev, feats = bilstm_crf_forward(
        sentence, params, h0, c0, start_idx, stop_idx)
    (score, path, first_prev, feats) = jax.block_until_ready(
        (score, path, first_prev, feats))

    ref_score, ref_path, ref_feats = reference_forward(
        sentence, params, h0, c0, start_idx, stop_idx)

    assert np.allclose(np.asarray(feats), ref_feats, atol=2e-3, rtol=1e-3), \
        "lstm features mismatch"
    assert abs(float(score) - ref_score) < 1e-2, "path score mismatch"
    assert [int(t) for t in np.asarray(path)] == ref_path, "tag path mismatch"
    assert int(first_prev) == start_idx, "backtrack did not end at START tag"

    print("KERNEL_OK")
</pallas_src>

<mosaic_0001>
module attributes {stable_mosaic.version = 11 : i64} {
  func.func @kernel(%arg0: memref<8x64xf32, #tpu.memory_space<vmem>>, %arg1: memref<64x128xf32, #tpu.memory_space<vmem>>, %arg2: memref<32x128xf32, #tpu.memory_space<vmem>>, %arg3: memref<32x128xf32, #tpu.memory_space<vmem>>, %arg4: memref<5x5xf32, #tpu.memory_space<vmem>>, %arg5: memref<4x128xf32, #tpu.memory_space<vmem>>, %arg6: memref<8x128xf32, #tpu.memory_space<vmem>>, %arg7: memref<1x128xf32, #tpu.memory_space<vmem>>) attributes {dimension_semantics = [], scalar_prefetch = 0 : i64, scratch_operands = 0 : i64, tpu.core_type = #tpu.core_type<tc>} {
    %c0 = arith.constant 0 : index
    %c0_0 = arith.constant 0 : index
    %0 = vector.load %arg5[%c0, %c0_0] : memref<4x128xf32, #tpu.memory_space<vmem>>, vector<4x128xf32>
    %1 = vector.extract_strided_slice %0 {offsets = [0, 0], sizes = [1, 32], strides = [1, 1]} : vector<4x128xf32> to vector<1x32xf32>
    %2 = vector.extract_strided_slice %0 {offsets = [0, 32], sizes = [1, 32], strides = [1, 1]} : vector<4x128xf32> to vector<1x32xf32>
    %3 = vector.extract_strided_slice %0 {offsets = [1, 0], sizes = [1, 5], strides = [1, 1]} : vector<4x128xf32> to vector<1x5xf32>
    %4 = vector.extract_strided_slice %0 {offsets = [2, 0], sizes = [1, 128], strides = [1, 1]} : vector<4x128xf32> to vector<1x128xf32>
    %5 = vector.extract_strided_slice %0 {offsets = [3, 0], sizes = [1, 128], strides = [1, 1]} : vector<4x128xf32> to vector<1x128xf32>
    %c0_1 = arith.constant 0 : index
    %c0_2 = arith.constant 0 : index
    %6 = vector.load %arg0[%c0_1, %c0_2] : memref<8x64xf32, #tpu.memory_space<vmem>>, vector<8x64xf32>
    %c0_3 = arith.constant 0 : index
    %c0_4 = arith.constant 0 : index
    %7 = vector.load %arg1[%c0_3, %c0_4] : memref<64x128xf32, #tpu.memory_space<vmem>>, vector<64x128xf32>
    %cst = arith.constant dense<0.000000e+00> : vector<8x128xf32>
    %8 = tpu.matmul %6, %7, %cst {dimension_numbers = #tpu.dot_dimension_numbers<[1], [0], [0], [1], [0, 0, 1, 1], [], []>} : vector<8x64xf32>, vector<64x128xf32>, vector<8x128xf32> -> vector<8x128xf32>
    %9 = vector.broadcast %4 : vector<1x128xf32> to vector<8x128xf32>
    %10 = arith.addf %8, %9 : vector<8x128xf32>
    %c0_5 = arith.constant 0 : index
    %c0_6 = arith.constant 0 : index
    %11 = vector.load %arg2[%c0_5, %c0_6] : memref<32x128xf32, #tpu.memory_space<vmem>>, vector<32x128xf32>
    %12 = tpu.iota {dimensions = array<i32: 0>} : vector<8x1xi32>
    %cst_7 = arith.constant 0.000000e+00 : f32
    %13 = vector.broadcast %cst_7 : f32 to vector<8x16xf32>
    %cst_8 = arith.constant 0.000000e+00 : f32
    %14 = vector.broadcast %cst_8 : f32 to vector<8x16xf32>
    %15 = vector.extract_strided_slice %10 {offsets = [0, 0], sizes = [1, 128], strides = [1, 1]} : vector<8x128xf32> to vector<1x128xf32>
    %cst_9 = arith.constant dense<0.000000e+00> : vector<1x128xf32>
    %16 = tpu.matmul %1, %11, %cst_9 {dimension_numbers = #tpu.dot_dimension_numbers<[1], [0], [0], [1], [0, 0, 1, 1], [], []>} : vector<1x32xf32>, vector<32x128xf32>, vector<1x128xf32> -> vector<1x128xf32>
    %17 = arith.addf %15, %16 : vector<1x128xf32>
    %18 = arith.negf %17 : vector<1x128xf32>
    %19 = math.exp %18 : vector<1x128xf32>
    %cst_10 = arith.constant 1.000000e+00 : f32
    %20 = vector.broadcast %cst_10 : f32 to vector<1x128xf32>
    %21 = arith.addf %20, %19 : vector<1x128xf32>
    %22 = arith.divf %20, %21 : vector<1x128xf32>
    %23 = vector.extract_strided_slice %22 {offsets = [0, 0], sizes = [1, 32], strides = [1, 1]} : vector<1x128xf32> to vector<1x32xf32>
    %24 = vector.extract_strided_slice %22 {offsets = [0, 32], sizes = [1, 32], strides = [1, 1]} : vector<1x128xf32> to vector<1x32xf32>
    %25 = vector.extract_strided_slice %17 {offsets = [0, 64], sizes = [1, 32], strides = [1, 1]} : vector<1x128xf32> to vector<1x32xf32>
    %26 = math.tanh %25 : vector<1x32xf32>
    %27 = vector.extract_strided_slice %22 {offsets = [0, 96], sizes = [1, 32], strides = [1, 1]} : vector<1x128xf32> to vector<1x32xf32>
    %28 = arith.mulf %24, %2 : vector<1x32xf32>
    %29 = arith.mulf %23, %26 : vector<1x32xf32>
    %30 = arith.addf %28, %29 : vector<1x32xf32>
    %31 = math.tanh %30 : vector<1x32xf32>
    %32 = arith.mulf %27, %31 : vector<1x32xf32>
    %c0_i32 = arith.constant 0 : i32
    %33 = vector.broadcast %c0_i32 : i32 to vector<8x1xi32>
    %34 = arith.cmpi eq, %12, %33 : vector<8x1xi32>
    %35 = arith.extui %34 : vector<8x1xi1> to vector<8x1xi32>
    %36 = arith.sitofp %35 : vector<8x1xi32> to vector<8x1xf32>
    %37 = vector.extract_strided_slice %32 {offsets = [0, 0], sizes = [1, 16], strides = [1, 1]} : vector<1x32xf32> to vector<1x16xf32>
    %38 = vector.broadcast %36 : vector<8x1xf32> to vector<8x16xf32>
    %39 = vector.broadcast %37 : vector<1x16xf32> to vector<8x16xf32>
    %40 = arith.mulf %38, %39 : vector<8x16xf32>
    %41 = arith.addf %13, %40 : vector<8x16xf32>
    %c7_i32 = arith.constant 7 : i32
    %42 = vector.broadcast %c7_i32 : i32 to vector<8x1xi32>
    %43 = arith.cmpi eq, %12, %42 : vector<8x1xi32>
    %44 = arith.extui %43 : vector<8x1xi1> to vector<8x1xi32>
    %45 = arith.sitofp %44 : vector<8x1xi32> to vector<8x1xf32>
    %46 = vector.extract_strided_slice %32 {offsets = [0, 16], sizes = [1, 16], strides = [1, 1]} : vector<1x32xf32> to vector<1x16xf32>
    %47 = vector.broadcast %45 : vector<8x1xf32> to vector<8x16xf32>
    %48 = vector.broadcast %46 : vector<1x16xf32> to vector<8x16xf32>
    %49 = arith.mulf %47, %48 : vector<8x16xf32>
    %50 = arith.addf %14, %49 : vector<8x16xf32>
    %51 = vector.extract_strided_slice %10 {offsets = [1, 0], sizes = [1, 128], strides = [1, 1]} : vector<8x128xf32> to vector<1x128xf32>
    %cst_11 = arith.constant dense<0.000000e+00> : vector<1x128xf32>
    %52 = tpu.matmul %32, %11, %cst_11 {dimension_numbers = #tpu.dot_dimension_numbers<[1], [0], [0], [1], [0, 0, 1, 1], [], []>} : vector<1x32xf32>, vector<32x128xf32>, vector<1x128xf32> -> vector<1x128xf32>
    %53 = arith.addf %51, %52 : vector<1x128xf32>
    %54 = arith.negf %53 : vector<1x128xf32>
    %55 = math.exp %54 : vector<1x128xf32>
    %cst_12 = arith.constant 1.000000e+00 : f32
    %56 = vector.broadcast %cst_12 : f32 to vector<1x128xf32>
    %57 = arith.addf %56, %55 : vector<1x128xf32>
    %58 = arith.divf %56, %57 : vector<1x128xf32>
    %59 = vector.extract_strided_slice %58 {offsets = [0, 0], sizes = [1, 32], strides = [1, 1]} : vector<1x128xf32> to vector<1x32xf32>
    %60 = vector.extract_strided_slice %58 {offsets = [0, 32], sizes = [1, 32], strides = [1, 1]} : vector<1x128xf32> to vector<1x32xf32>
    %61 = vector.extract_strided_slice %53 {offsets = [0, 64], sizes = [1, 32], strides = [1, 1]} : vector<1x128xf32> to vector<1x32xf32>
    %62 = math.tanh %61 : vector<1x32xf32>
    %63 = vector.extract_strided_slice %58 {offsets = [0, 96], sizes = [1, 32], strides = [1, 1]} : vector<1x128xf32> to vector<1x32xf32>
    %64 = arith.mulf %60, %30 : vector<1x32xf32>
    %65 = arith.mulf %59, %62 : vector<1x32xf32>
    %66 = arith.addf %64, %65 : vector<1x32xf32>
    %67 = math.tanh %66 : vector<1x32xf32>
    %68 = arith.mulf %63, %67 : vector<1x32xf32>
    %c1_i32 = arith.constant 1 : i32
    %69 = vector.broadcast %c1_i32 : i32 to vector<8x1xi32>
    %70 = arith.cmpi eq, %12, %69 : vector<8x1xi32>
    %71 = arith.extui %70 : vector<8x1xi1> to vector<8x1xi32>
    %72 = arith.sitofp %71 : vector<8x1xi32> to vector<8x1xf32>
    %73 = vector.extract_strided_slice %68 {offsets = [0, 0], sizes = [1, 16], strides = [1, 1]} : vector<1x32xf32> to vector<1x16xf32>
    %74 = vector.broadcast %72 : vector<8x1xf32> to vector<8x16xf32>
    %75 = vector.broadcast %73 : vector<1x16xf32> to vector<8x16xf32>
    %76 = arith.mulf %74, %75 : vector<8x16xf32>
    %77 = arith.addf %41, %76 : vector<8x16xf32>
    %c6_i32 = arith.constant 6 : i32
    %78 = vector.broadcast %c6_i32 : i32 to vector<8x1xi32>
    %79 = arith.cmpi eq, %12, %78 : vector<8x1xi32>
    %80 = arith.extui %79 : vector<8x1xi1> to vector<8x1xi32>
    %81 = arith.sitofp %80 : vector<8x1xi32> to vector<8x1xf32>
    %82 = vector.extract_strided_slice %68 {offsets = [0, 16], sizes = [1, 16], strides = [1, 1]} : vector<1x32xf32> to vector<1x16xf32>
    %83 = vector.broadcast %81 : vector<8x1xf32> to vector<8x16xf32>
    %84 = vector.broadcast %82 : vector<1x16xf32> to vector<8x16xf32>
    %85 = arith.mulf %83, %84 : vector<8x16xf32>
    %86 = arith.addf %50, %85 : vector<8x16xf32>
    %87 = vector.extract_strided_slice %10 {offsets = [2, 0], sizes = [1, 128], strides = [1, 1]} : vector<8x128xf32> to vector<1x128xf32>
    %cst_13 = arith.constant dense<0.000000e+00> : vector<1x128xf32>
    %88 = tpu.matmul %68, %11, %cst_13 {dimension_numbers = #tpu.dot_dimension_numbers<[1], [0], [0], [1], [0, 0, 1, 1], [], []>} : vector<1x32xf32>, vector<32x128xf32>, vector<1x128xf32> -> vector<1x128xf32>
    %89 = arith.addf %87, %88 : vector<1x128xf32>
    %90 = arith.negf %89 : vector<1x128xf32>
    %91 = math.exp %90 : vector<1x128xf32>
    %cst_14 = arith.constant 1.000000e+00 : f32
    %92 = vector.broadcast %cst_14 : f32 to vector<1x128xf32>
    %93 = arith.addf %92, %91 : vector<1x128xf32>
    %94 = arith.divf %92, %93 : vector<1x128xf32>
    %95 = vector.extract_strided_slice %94 {offsets = [0, 0], sizes = [1, 32], strides = [1, 1]} : vector<1x128xf32> to vector<1x32xf32>
    %96 = vector.extract_strided_slice %94 {offsets = [0, 32], sizes = [1, 32], strides = [1, 1]} : vector<1x128xf32> to vector<1x32xf32>
    %97 = vector.extract_strided_slice %89 {offsets = [0, 64], sizes = [1, 32], strides = [1, 1]} : vector<1x128xf32> to vector<1x32xf32>
    %98 = math.tanh %97 : vector<1x32xf32>
    %99 = vector.extract_strided_slice %94 {offsets = [0, 96], sizes = [1, 32], strides = [1, 1]} : vector<1x128xf32> to vector<1x32xf32>
    %100 = arith.mulf %96, %66 : vector<1x32xf32>
    %101 = arith.mulf %95, %98 : vector<1x32xf32>
    %102 = arith.addf %100, %101 : vector<1x32xf32>
    %103 = math.tanh %102 : vector<1x32xf32>
    %104 = arith.mulf %99, %103 : vector<1x32xf32>
    %c2_i32 = arith.constant 2 : i32
    %105 = vector.broadcast %c2_i32 : i32 to vector<8x1xi32>
    %106 = arith.cmpi eq, %12, %105 : vector<8x1xi32>
    %107 = arith.extui %106 : vector<8x1xi1> to vector<8x1xi32>
    %108 = arith.sitofp %107 : vector<8x1xi32> to vector<8x1xf32>
    %109 = vector.extract_strided_slice %104 {offsets = [0, 0], sizes = [1, 16], strides = [1, 1]} : vector<1x32xf32> to vector<1x16xf32>
    %110 = vector.broadcast %108 : vector<8x1xf32> to vector<8x16xf32>
    %111 = vector.broadcast %109 : vector<1x16xf32> to vector<8x16xf32>
    %112 = arith.mulf %110, %111 : vector<8x16xf32>
    %113 = arith.addf %77, %112 : vector<8x16xf32>
    %c5_i32 = arith.constant 5 : i32
    %114 = vector.broadcast %c5_i32 : i32 to vector<8x1xi32>
    %115 = arith.cmpi eq, %12, %114 : vector<8x1xi32>
    %116 = arith.extui %115 : vector<8x1xi1> to vector<8x1xi32>
    %117 = arith.sitofp %116 : vector<8x1xi32> to vector<8x1xf32>
    %118 = vector.extract_strided_slice %104 {offsets = [0, 16], sizes = [1, 16], strides = [1, 1]} : vector<1x32xf32> to vector<1x16xf32>
    %119 = vector.broadcast %117 : vector<8x1xf32> to vector<8x16xf32>
    %120 = vector.broadcast %118 : vector<1x16xf32> to vector<8x16xf32>
    %121 = arith.mulf %119, %120 : vector<8x16xf32>
    %122 = arith.addf %86, %121 : vector<8x16xf32>
    %123 = vector.extract_strided_slice %10 {offsets = [3, 0], sizes = [1, 128], strides = [1, 1]} : vector<8x128xf32> to vector<1x128xf32>
    %cst_15 = arith.constant dense<0.000000e+00> : vector<1x128xf32>
    %124 = tpu.matmul %104, %11, %cst_15 {dimension_numbers = #tpu.dot_dimension_numbers<[1], [0], [0], [1], [0, 0, 1, 1], [], []>} : vector<1x32xf32>, vector<32x128xf32>, vector<1x128xf32> -> vector<1x128xf32>
    %125 = arith.addf %123, %124 : vector<1x128xf32>
    %126 = arith.negf %125 : vector<1x128xf32>
    %127 = math.exp %126 : vector<1x128xf32>
    %cst_16 = arith.constant 1.000000e+00 : f32
    %128 = vector.broadcast %cst_16 : f32 to vector<1x128xf32>
    %129 = arith.addf %128, %127 : vector<1x128xf32>
    %130 = arith.divf %128, %129 : vector<1x128xf32>
    %131 = vector.extract_strided_slice %130 {offsets = [0, 0], sizes = [1, 32], strides = [1, 1]} : vector<1x128xf32> to vector<1x32xf32>
    %132 = vector.extract_strided_slice %130 {offsets = [0, 32], sizes = [1, 32], strides = [1, 1]} : vector<1x128xf32> to vector<1x32xf32>
    %133 = vector.extract_strided_slice %125 {offsets = [0, 64], sizes = [1, 32], strides = [1, 1]} : vector<1x128xf32> to vector<1x32xf32>
    %134 = math.tanh %133 : vector<1x32xf32>
    %135 = vector.extract_strided_slice %130 {offsets = [0, 96], sizes = [1, 32], strides = [1, 1]} : vector<1x128xf32> to vector<1x32xf32>
    %136 = arith.mulf %132, %102 : vector<1x32xf32>
    %137 = arith.mulf %131, %134 : vector<1x32xf32>
    %138 = arith.addf %136, %137 : vector<1x32xf32>
    %139 = math.tanh %138 : vector<1x32xf32>
    %140 = arith.mulf %135, %139 : vector<1x32xf32>
    %c3_i32 = arith.constant 3 : i32
    %141 = vector.broadcast %c3_i32 : i32 to vector<8x1xi32>
    %142 = arith.cmpi eq, %12, %141 : vector<8x1xi32>
    %143 = arith.extui %142 : vector<8x1xi1> to vector<8x1xi32>
    %144 = arith.sitofp %143 : vector<8x1xi32> to vector<8x1xf32>
    %145 = vector.extract_strided_slice %140 {offsets = [0, 0], sizes = [1, 16], strides = [1, 1]} : vector<1x32xf32> to vector<1x16xf32>
    %146 = vector.broadcast %144 : vector<8x1xf32> to vector<8x16xf32>
    %147 = vector.broadcast %145 : vector<1x16xf32> to vector<8x16xf32>
    %148 = arith.mulf %146, %147 : vector<8x16xf32>
    %149 = arith.addf %113, %148 : vector<8x16xf32>
    %c4_i32 = arith.constant 4 : i32
    %150 = vector.broadcast %c4_i32 : i32 to vector<8x1xi32>
    %151 = arith.cmpi eq, %12, %150 : vector<8x1xi32>
    %152 = arith.extui %151 : vector<8x1xi1> to vector<8x1xi32>
    %153 = arith.sitofp %152 : vector<8x1xi32> to vector<8x1xf32>
    %154 = vector.extract_strided_slice %140 {offsets = [0, 16], sizes = [1, 16], strides = [1, 1]} : vector<1x32xf32> to vector<1x16xf32>
    %155 = vector.broadcast %153 : vector<8x1xf32> to vector<8x16xf32>
    %156 = vector.broadcast %154 : vector<1x16xf32> to vector<8x16xf32>
    %157 = arith.mulf %155, %156 : vector<8x16xf32>
    %158 = arith.addf %122, %157 : vector<8x16xf32>
    %159 = vector.extract_strided_slice %10 {offsets = [4, 0], sizes = [1, 128], strides = [1, 1]} : vector<8x128xf32> to vector<1x128xf32>
    %cst_17 = arith.constant dense<0.000000e+00> : vector<1x128xf32>
    %160 = tpu.matmul %140, %11, %cst_17 {dimension_numbers = #tpu.dot_dimension_numbers<[1], [0], [0], [1], [0, 0, 1, 1], [], []>} : vector<1x32xf32>, vector<32x128xf32>, vector<1x128xf32> -> vector<1x128xf32>
    %161 = arith.addf %159, %160 : vector<1x128xf32>
    %162 = arith.negf %161 : vector<1x128xf32>
    %163 = math.exp %162 : vector<1x128xf32>
    %cst_18 = arith.constant 1.000000e+00 : f32
    %164 = vector.broadcast %cst_18 : f32 to vector<1x128xf32>
    %165 = arith.addf %164, %163 : vector<1x128xf32>
    %166 = arith.divf %164, %165 : vector<1x128xf32>
    %167 = vector.extract_strided_slice %166 {offsets = [0, 0], sizes = [1, 32], strides = [1, 1]} : vector<1x128xf32> to vector<1x32xf32>
    %168 = vector.extract_strided_slice %166 {offsets = [0, 32], sizes = [1, 32], strides = [1, 1]} : vector<1x128xf32> to vector<1x32xf32>
    %169 = vector.extract_strided_slice %161 {offsets = [0, 64], sizes = [1, 32], strides = [1, 1]} : vector<1x128xf32> to vector<1x32xf32>
    %170 = math.tanh %169 : vector<1x32xf32>
    %171 = vector.extract_strided_slice %166 {offsets = [0, 96], sizes = [1, 32], strides = [1, 1]} : vector<1x128xf32> to vector<1x32xf32>
    %172 = arith.mulf %168, %138 : vector<1x32xf32>
    %173 = arith.mulf %167, %170 : vector<1x32xf32>
    %174 = arith.addf %172, %173 : vector<1x32xf32>
    %175 = math.tanh %174 : vector<1x32xf32>
    %176 = arith.mulf %171, %175 : vector<1x32xf32>
    %c4_i32_19 = arith.constant 4 : i32
    %177 = vector.broadcast %c4_i32_19 : i32 to vector<8x1xi32>
    %178 = arith.cmpi eq, %12, %177 : vector<8x1xi32>
    %179 = arith.extui %178 : vector<8x1xi1> to vector<8x1xi32>
    %180 = arith.sitofp %179 : vector<8x1xi32> to vector<8x1xf32>
    %181 = vector.extract_strided_slice %176 {offsets = [0, 0], sizes = [1, 16], strides = [1, 1]} : vector<1x32xf32> to vector<1x16xf32>
    %182 = vector.broadcast %180 : vector<8x1xf32> to vector<8x16xf32>
    %183 = vector.broadcast %181 : vector<1x16xf32> to vector<8x16xf32>
    %184 = arith.mulf %182, %183 : vector<8x16xf32>
    %185 = arith.addf %149, %184 : vector<8x16xf32>
    %c3_i32_20 = arith.constant 3 : i32
    %186 = vector.broadcast %c3_i32_20 : i32 to vector<8x1xi32>
    %187 = arith.cmpi eq, %12, %186 : vector<8x1xi32>
    %188 = arith.extui %187 : vector<8x1xi1> to vector<8x1xi32>
    %189 = arith.sitofp %188 : vector<8x1xi32> to vector<8x1xf32>
    %190 = vector.extract_strided_slice %176 {offsets = [0, 16], sizes = [1, 16], strides = [1, 1]} : vector<1x32xf32> to vector<1x16xf32>
    %191 = vector.broadcast %189 : vector<8x1xf32> to vector<8x16xf32>
    %192 = vector.broadcast %190 : vector<1x16xf32> to vector<8x16xf32>
    %193 = arith.mulf %191, %192 : vector<8x16xf32>
    %194 = arith.addf %158, %193 : vector<8x16xf32>
    %195 = vector.extract_strided_slice %10 {offsets = [5, 0], sizes = [1, 128], strides = [1, 1]} : vector<8x128xf32> to vector<1x128xf32>
    %cst_21 = arith.constant dense<0.000000e+00> : vector<1x128xf32>
    %196 = tpu.matmul %176, %11, %cst_21 {dimension_numbers = #tpu.dot_dimension_numbers<[1], [0], [0], [1], [0, 0, 1, 1], [], []>} : vector<1x32xf32>, vector<32x128xf32>, vector<1x128xf32> -> vector<1x128xf32>
    %197 = arith.addf %195, %196 : vector<1x128xf32>
    %198 = arith.negf %197 : vector<1x128xf32>
    %199 = math.exp %198 : vector<1x128xf32>
    %cst_22 = arith.constant 1.000000e+00 : f32
    %200 = vector.broadcast %cst_22 : f32 to vector<1x128xf32>
    %201 = arith.addf %200, %199 : vector<1x128xf32>
    %202 = arith.divf %200, %201 : vector<1x128xf32>
    %203 = vector.extract_strided_slice %202 {offsets = [0, 0], sizes = [1, 32], strides = [1, 1]} : vector<1x128xf32> to vector<1x32xf32>
    %204 = vector.extract_strided_slice %202 {offsets = [0, 32], sizes = [1, 32], strides = [1, 1]} : vector<1x128xf32> to vector<1x32xf32>
    %205 = vector.extract_strided_slice %197 {offsets = [0, 64], sizes = [1, 32], strides = [1, 1]} : vector<1x128xf32> to vector<1x32xf32>
    %206 = math.tanh %205 : vector<1x32xf32>
    %207 = vector.extract_strided_slice %202 {offsets = [0, 96], sizes = [1, 32], strides = [1, 1]} : vector<1x128xf32> to vector<1x32xf32>
    %208 = arith.mulf %204, %174 : vector<1x32xf32>
    %209 = arith.mulf %203, %206 : vector<1x32xf32>
    %210 = arith.addf %208, %209 : vector<1x32xf32>
    %211 = math.tanh %210 : vector<1x32xf32>
    %212 = arith.mulf %207, %211 : vector<1x32xf32>
    %c5_i32_23 = arith.constant 5 : i32
    %213 = vector.broadcast %c5_i32_23 : i32 to vector<8x1xi32>
    %214 = arith.cmpi eq, %12, %213 : vector<8x1xi32>
    %215 = arith.extui %214 : vector<8x1xi1> to vector<8x1xi32>
    %216 = arith.sitofp %215 : vector<8x1xi32> to vector<8x1xf32>
    %217 = vector.extract_strided_slice %212 {offsets = [0, 0], sizes = [1, 16], strides = [1, 1]} : vector<1x32xf32> to vector<1x16xf32>
    %218 = vector.broadcast %216 : vector<8x1xf32> to vector<8x16xf32>
    %219 = vector.broadcast %217 : vector<1x16xf32> to vector<8x16xf32>
    %220 = arith.mulf %218, %219 : vector<8x16xf32>
    %221 = arith.addf %185, %220 : vector<8x16xf32>
    %c2_i32_24 = arith.constant 2 : i32
    %222 = vector.broadcast %c2_i32_24 : i32 to vector<8x1xi32>
    %223 = arith.cmpi eq, %12, %222 : vector<8x1xi32>
    %224 = arith.extui %223 : vector<8x1xi1> to vector<8x1xi32>
    %225 = arith.sitofp %224 : vector<8x1xi32> to vector<8x1xf32>
    %226 = vector.extract_strided_slice %212 {offsets = [0, 16], sizes = [1, 16], strides = [1, 1]} : vector<1x32xf32> to vector<1x16xf32>
    %227 = vector.broadcast %225 : vector<8x1xf32> to vector<8x16xf32>
    %228 = vector.broadcast %226 : vector<1x16xf32> to vector<8x16xf32>
    %229 = arith.mulf %227, %228 : vector<8x16xf32>
    %230 = arith.addf %194, %229 : vector<8x16xf32>
    %231 = vector.extract_strided_slice %10 {offsets = [6, 0], sizes = [1, 128], strides = [1, 1]} : vector<8x128xf32> to vector<1x128xf32>
    %cst_25 = arith.constant dense<0.000000e+00> : vector<1x128xf32>
    %232 = tpu.matmul %212, %11, %cst_25 {dimension_numbers = #tpu.dot_dimension_numbers<[1], [0], [0], [1], [0, 0, 1, 1], [], []>} : vector<1x32xf32>, vector<32x128xf32>, vector<1x128xf32> -> vector<1x128xf32>
    %233 = arith.addf %231, %232 : vector<1x128xf32>
    %234 = arith.negf %233 : vector<1x128xf32>
    %235 = math.exp %234 : vector<1x128xf32>
    %cst_26 = arith.constant 1.000000e+00 : f32
    %236 = vector.broadcast %cst_26 : f32 to vector<1x128xf32>
    %237 = arith.addf %236, %235 : vector<1x128xf32>
    %238 = arith.divf %236, %237 : vector<1x128xf32>
    %239 = vector.extract_strided_slice %238 {offsets = [0, 0], sizes = [1, 32], strides = [1, 1]} : vector<1x128xf32> to vector<1x32xf32>
    %240 = vector.extract_strided_slice %238 {offsets = [0, 32], sizes = [1, 32], strides = [1, 1]} : vector<1x128xf32> to vector<1x32xf32>
    %241 = vector.extract_strided_slice %233 {offsets = [0, 64], sizes = [1, 32], strides = [1, 1]} : vector<1x128xf32> to vector<1x32xf32>
    %242 = math.tanh %241 : vector<1x32xf32>
    %243 = vector.extract_strided_slice %238 {offsets = [0, 96], sizes = [1, 32], strides = [1, 1]} : vector<1x128xf32> to vector<1x32xf32>
    %244 = arith.mulf %240, %210 : vector<1x32xf32>
    %245 = arith.mulf %239, %242 : vector<1x32xf32>
    %246 = arith.addf %244, %245 : vector<1x32xf32>
    %247 = math.tanh %246 : vector<1x32xf32>
    %248 = arith.mulf %243, %247 : vector<1x32xf32>
    %c6_i32_27 = arith.constant 6 : i32
    %249 = vector.broadcast %c6_i32_27 : i32 to vector<8x1xi32>
    %250 = arith.cmpi eq, %12, %249 : vector<8x1xi32>
    %251 = arith.extui %250 : vector<8x1xi1> to vector<8x1xi32>
    %252 = arith.sitofp %251 : vector<8x1xi32> to vector<8x1xf32>
    %253 = vector.extract_strided_slice %248 {offsets = [0, 0], sizes = [1, 16], strides = [1, 1]} : vector<1x32xf32> to vector<1x16xf32>
    %254 = vector.broadcast %252 : vector<8x1xf32> to vector<8x16xf32>
    %255 = vector.broadcast %253 : vector<1x16xf32> to vector<8x16xf32>
    %256 = arith.mulf %254, %255 : vector<8x16xf32>
    %257 = arith.addf %221, %256 : vector<8x16xf32>
    %c1_i32_28 = arith.constant 1 : i32
    %258 = vector.broadcast %c1_i32_28 : i32 to vector<8x1xi32>
    %259 = arith.cmpi eq, %12, %258 : vector<8x1xi32>
    %260 = arith.extui %259 : vector<8x1xi1> to vector<8x1xi32>
    %261 = arith.sitofp %260 : vector<8x1xi32> to vector<8x1xf32>
    %262 = vector.extract_strided_slice %248 {offsets = [0, 16], sizes = [1, 16], strides = [1, 1]} : vector<1x32xf32> to vector<1x16xf32>
    %263 = vector.broadcast %261 : vector<8x1xf32> to vector<8x16xf32>
    %264 = vector.broadcast %262 : vector<1x16xf32> to vector<8x16xf32>
    %265 = arith.mulf %263, %264 : vector<8x16xf32>
    %266 = arith.addf %230, %265 : vector<8x16xf32>
    %267 = vector.extract_strided_slice %10 {offsets = [7, 0], sizes = [1, 128], strides = [1, 1]} : vector<8x128xf32> to vector<1x128xf32>
    %cst_29 = arith.constant dense<0.000000e+00> : vector<1x128xf32>
    %268 = tpu.matmul %248, %11, %cst_29 {dimension_numbers = #tpu.dot_dimension_numbers<[1], [0], [0], [1], [0, 0, 1, 1], [], []>} : vector<1x32xf32>, vector<32x128xf32>, vector<1x128xf32> -> vector<1x128xf32>
    %269 = arith.addf %267, %268 : vector<1x128xf32>
    %270 = arith.negf %269 : vector<1x128xf32>
    %271 = math.exp %270 : vector<1x128xf32>
    %cst_30 = arith.constant 1.000000e+00 : f32
    %272 = vector.broadcast %cst_30 : f32 to vector<1x128xf32>
    %273 = arith.addf %272, %271 : vector<1x128xf32>
    %274 = arith.divf %272, %273 : vector<1x128xf32>
    %275 = vector.extract_strided_slice %274 {offsets = [0, 0], sizes = [1, 32], strides = [1, 1]} : vector<1x128xf32> to vector<1x32xf32>
    %276 = vector.extract_strided_slice %274 {offsets = [0, 32], sizes = [1, 32], strides = [1, 1]} : vector<1x128xf32> to vector<1x32xf32>
    %277 = vector.extract_strided_slice %269 {offsets = [0, 64], sizes = [1, 32], strides = [1, 1]} : vector<1x128xf32> to vector<1x32xf32>
    %278 = math.tanh %277 : vector<1x32xf32>
    %279 = vector.extract_strided_slice %274 {offsets = [0, 96], sizes = [1, 32], strides = [1, 1]} : vector<1x128xf32> to vector<1x32xf32>
    %280 = arith.mulf %276, %246 : vector<1x32xf32>
    %281 = arith.mulf %275, %278 : vector<1x32xf32>
    %282 = arith.addf %280, %281 : vector<1x32xf32>
    %283 = math.tanh %282 : vector<1x32xf32>
    %284 = arith.mulf %279, %283 : vector<1x32xf32>
    %c7_i32_31 = arith.constant 7 : i32
    %285 = vector.broadcast %c7_i32_31 : i32 to vector<8x1xi32>
    %286 = arith.cmpi eq, %12, %285 : vector<8x1xi32>
    %287 = arith.extui %286 : vector<8x1xi1> to vector<8x1xi32>
    %288 = arith.sitofp %287 : vector<8x1xi32> to vector<8x1xf32>
    %289 = vector.extract_strided_slice %284 {offsets = [0, 0], sizes = [1, 16], strides = [1, 1]} : vector<1x32xf32> to vector<1x16xf32>
    %290 = vector.broadcast %288 : vector<8x1xf32> to vector<8x16xf32>
    %291 = vector.broadcast %289 : vector<1x16xf32> to vector<8x16xf32>
    %292 = arith.mulf %290, %291 : vector<8x16xf32>
    %293 = arith.addf %257, %292 : vector<8x16xf32>
    %c0_i32_32 = arith.constant 0 : i32
    %294 = vector.broadcast %c0_i32_32 : i32 to vector<8x1xi32>
    %295 = arith.cmpi eq, %12, %294 : vector<8x1xi32>
    %296 = arith.extui %295 : vector<8x1xi1> to vector<8x1xi32>
    %297 = arith.sitofp %296 : vector<8x1xi32> to vector<8x1xf32>
    %298 = vector.extract_strided_slice %284 {offsets = [0, 16], sizes = [1, 16], strides = [1, 1]} : vector<1x32xf32> to vector<1x16xf32>
    %299 = vector.broadcast %297 : vector<8x1xf32> to vector<8x16xf32>
    %300 = vector.broadcast %298 : vector<1x16xf32> to vector<8x16xf32>
    %301 = arith.mulf %299, %300 : vector<8x16xf32>
    %302 = arith.addf %266, %301 : vector<8x16xf32>
    %c0_33 = arith.constant 0 : index
    %c0_34 = arith.constant 0 : index
    %303 = vector.load %arg3[%c0_33, %c0_34] : memref<32x128xf32, #tpu.memory_space<vmem>>, vector<32x128xf32>
    %304 = vector.extract_strided_slice %303 {offsets = [0, 0], sizes = [16, 128], strides = [1, 1]} : vector<32x128xf32> to vector<16x128xf32>
    %cst_35 = arith.constant dense<0.000000e+00> : vector<8x128xf32>
    %305 = tpu.matmul %293, %304, %cst_35 {dimension_numbers = #tpu.dot_dimension_numbers<[1], [0], [0], [1], [0, 0, 1, 1], [], []>} : vector<8x16xf32>, vector<16x128xf32>, vector<8x128xf32> -> vector<8x128xf32>
    %306 = vector.extract_strided_slice %303 {offsets = [16, 0], sizes = [16, 128], strides = [1, 1]} : vector<32x128xf32> to vector<16x128xf32>
    %cst_36 = arith.constant dense<0.000000e+00> : vector<8x128xf32>
    %307 = tpu.matmul %302, %306, %cst_36 {dimension_numbers = #tpu.dot_dimension_numbers<[1], [0], [0], [1], [0, 0, 1, 1], [], []>} : vector<8x16xf32>, vector<16x128xf32>, vector<8x128xf32> -> vector<8x128xf32>
    %308 = arith.addf %305, %307 : vector<8x128xf32>
    %309 = vector.broadcast %5 : vector<1x128xf32> to vector<8x128xf32>
    %310 = arith.addf %308, %309 : vector<8x128xf32>
    %c0_37 = arith.constant 0 : index
    %c0_38 = arith.constant 0 : index
    %311 = vector.load %arg6[%c0_37, %c0_38] : memref<8x128xf32, #tpu.memory_space<vmem>>, vector<8x128xf32>
    tpu.vector_store %arg6[%c0_37, %c0_38], %310 {strides = array<i32>} : memref<8x128xf32, #tpu.memory_space<vmem>>, vector<8x128xf32>,
    %312 = tpu.iota {dimensions = array<i32: 1>} : vector<1x5xi32>
    %313 = arith.sitofp %312 : vector<1x5xi32> to vector<1x5xf32>
    %314 = tpu.iota {dimensions = array<i32: 0>} : vector<5x5xi32>
    %315 = arith.sitofp %314 : vector<5x5xi32> to vector<5x5xf32>
    %316 = tpu.iota {dimensions = array<i32: 0>} : vector<5x5xi32>
    %317 = tpu.iota {dimensions = array<i32: 1>} : vector<5x5xi32>
    %318 = arith.cmpi eq, %316, %317 : vector<5x5xi32>
    %319 = arith.extui %318 : vector<5x5xi1> to vector<5x5xi32>
    %320 = arith.sitofp %319 : vector<5x5xi32> to vector<5x5xf32>
    %c0_39 = arith.constant 0 : index
    %c0_40 = arith.constant 0 : index
    %321 = vector.load %arg4[%c0_39, %c0_40] : memref<5x5xf32, #tpu.memory_space<vmem>>, vector<5x5xf32>
    %cst_41 = arith.constant 3.000000e+00 : f32
    %322 = vector.broadcast %cst_41 : f32 to vector<1x5xf32>
    %323 = arith.cmpf oeq, %313, %322 : vector<1x5xf32>
    %cst_42 = arith.constant 0.000000e+00 : f32
    %cst_43 = arith.constant -1.000000e+04 : f32
    %324 = vector.broadcast %cst_42 : f32 to vector<1x5xf32>
    %325 = vector.broadcast %cst_43 : f32 to vector<1x5xf32>
    %326 = arith.select %323, %324, %325 : vector<1x5xi1>, vector<1x5xf32>
    %327 = vector.broadcast %326 : vector<1x5xf32> to vector<5x5xf32>
    %328 = arith.mulf %327, %320 : vector<5x5xf32>
    %cst_44 = arith.constant dense<0.000000e+00> : vector<5xf32>
    %329 = vector.multi_reduction <add>, %328, %cst_44 [1] : vector<5x5xf32> to vector<5xf32>
    %330 = vector.shape_cast %329 : vector<5xf32> to vector<5x1xf32>
    %331 = vector.broadcast %330 : vector<5x1xf32> to vector<5x5xf32>
    %332 = arith.addf %331, %321 : vector<5x5xf32>
    %cst_45 = arith.constant dense<0xFF800000> : vector<5xf32>
    %333 = vector.multi_reduction <maximumf>, %332, %cst_45 [0] : vector<5x5xf32> to vector<5xf32>
    %334 = vector.shape_cast %333 : vector<5xf32> to vector<1x5xf32>
    %335 = vector.broadcast %334 : vector<1x5xf32> to vector<5x5xf32>
    %336 = arith.cmpf oeq, %332, %335 : vector<5x5xf32>
    %cst_46 = arith.constant 5.000000e+00 : f32
    %337 = vector.broadcast %cst_46 : f32 to vector<5x5xf32>
    %338 = arith.select %336, %315, %337 : vector<5x5xi1>, vector<5x5xf32>
    %cst_47 = arith.constant dense<0x7F800000> : vector<5xf32>
    %339 = vector.multi_reduction <minimumf>, %338, %cst_47 [0] : vector<5x5xf32> to vector<5xf32>
    %340 = vector.shape_cast %339 : vector<5xf32> to vector<1x5xf32>
    %341 = vector.extract_strided_slice %310 {offsets = [0, 0], sizes = [1, 5], strides = [1, 1]} : vector<8x128xf32> to vector<1x5xf32>
    %342 = arith.addf %334, %341 : vector<1x5xf32>
    %343 = vector.broadcast %342 : vector<1x5xf32> to vector<5x5xf32>
    %344 = arith.mulf %343, %320 : vector<5x5xf32>
    %cst_48 = arith.constant dense<0.000000e+00> : vector<5xf32>
    %345 = vector.multi_reduction <add>, %344, %cst_48 [1] : vector<5x5xf32> to vector<5xf32>
    %346 = vector.shape_cast %345 : vector<5xf32> to vector<5x1xf32>
    %347 = vector.broadcast %346 : vector<5x1xf32> to vector<5x5xf32>
    %348 = arith.addf %347, %321 : vector<5x5xf32>
    %cst_49 = arith.constant dense<0xFF800000> : vector<5xf32>
    %349 = vector.multi_reduction <maximumf>, %348, %cst_49 [0] : vector<5x5xf32> to vector<5xf32>
    %350 = vector.shape_cast %349 : vector<5xf32> to vector<1x5xf32>
    %351 = vector.broadcast %350 : vector<1x5xf32> to vector<5x5xf32>
    %352 = arith.cmpf oeq, %348, %351 : vector<5x5xf32>
    %cst_50 = arith.constant 5.000000e+00 : f32
    %353 = vector.broadcast %cst_50 : f32 to vector<5x5xf32>
    %354 = arith.select %352, %315, %353 : vector<5x5xi1>, vector<5x5xf32>
    %cst_51 = arith.constant dense<0x7F800000> : vector<5xf32>
    %355 = vector.multi_reduction <minimumf>, %354, %cst_51 [0] : vector<5x5xf32> to vector<5xf32>
    %356 = vector.shape_cast %355 : vector<5xf32> to vector<1x5xf32>
    %357 = vector.extract_strided_slice %310 {offsets = [1, 0], sizes = [1, 5], strides = [1, 1]} : vector<8x128xf32> to vector<1x5xf32>
    %358 = arith.addf %350, %357 : vector<1x5xf32>
    %359 = vector.broadcast %358 : vector<1x5xf32> to vector<5x5xf32>
    %360 = arith.mulf %359, %320 : vector<5x5xf32>
    %cst_52 = arith.constant dense<0.000000e+00> : vector<5xf32>
    %361 = vector.multi_reduction <add>, %360, %cst_52 [1] : vector<5x5xf32> to vector<5xf32>
    %362 = vector.shape_cast %361 : vector<5xf32> to vector<5x1xf32>
    %363 = vector.broadcast %362 : vector<5x1xf32> to vector<5x5xf32>
    %364 = arith.addf %363, %321 : vector<5x5xf32>
    %cst_53 = arith.constant dense<0xFF800000> : vector<5xf32>
    %365 = vector.multi_reduction <maximumf>, %364, %cst_53 [0] : vector<5x5xf32> to vector<5xf32>
    %366 = vector.shape_cast %365 : vector<5xf32> to vector<1x5xf32>
    %367 = vector.broadcast %366 : vector<1x5xf32> to vector<5x5xf32>
    %368 = arith.cmpf oeq, %364, %367 : vector<5x5xf32>
    %cst_54 = arith.constant 5.000000e+00 : f32
    %369 = vector.broadcast %cst_54 : f32 to vector<5x5xf32>
    %370 = arith.select %368, %315, %369 : vector<5x5xi1>, vector<5x5xf32>
    %cst_55 = arith.constant dense<0x7F800000> : vector<5xf32>
    %371 = vector.multi_reduction <minimumf>, %370, %cst_55 [0] : vector<5x5xf32> to vector<5xf32>
    %372 = vector.shape_cast %371 : vector<5xf32> to vector<1x5xf32>
    %373 = vector.extract_strided_slice %310 {offsets = [2, 0], sizes = [1, 5], strides = [1, 1]} : vector<8x128xf32> to vector<1x5xf32>
    %374 = arith.addf %366, %373 : vector<1x5xf32>
    %375 = vector.broadcast %374 : vector<1x5xf32> to vector<5x5xf32>
    %376 = arith.mulf %375, %320 : vector<5x5xf32>
    %cst_56 = arith.constant dense<0.000000e+00> : vector<5xf32>
    %377 = vector.multi_reduction <add>, %376, %cst_56 [1] : vector<5x5xf32> to vector<5xf32>
    %378 = vector.shape_cast %377 : vector<5xf32> to vector<5x1xf32>
    %379 = vector.broadcast %378 : vector<5x1xf32> to vector<5x5xf32>
    %380 = arith.addf %379, %321 : vector<5x5xf32>
    %cst_57 = arith.constant dense<0xFF800000> : vector<5xf32>
    %381 = vector.multi_reduction <maximumf>, %380, %cst_57 [0] : vector<5x5xf32> to vector<5xf32>
    %382 = vector.shape_cast %381 : vector<5xf32> to vector<1x5xf32>
    %383 = vector.broadcast %382 : vector<1x5xf32> to vector<5x5xf32>
    %384 = arith.cmpf oeq, %380, %383 : vector<5x5xf32>
    %cst_58 = arith.constant 5.000000e+00 : f32
    %385 = vector.broadcast %cst_58 : f32 to vector<5x5xf32>
    %386 = arith.select %384, %315, %385 : vector<5x5xi1>, vector<5x5xf32>
    %cst_59 = arith.constant dense<0x7F800000> : vector<5xf32>
    %387 = vector.multi_reduction <minimumf>, %386, %cst_59 [0] : vector<5x5xf32> to vector<5xf32>
    %388 = vector.shape_cast %387 : vector<5xf32> to vector<1x5xf32>
    %389 = vector.extract_strided_slice %310 {offsets = [3, 0], sizes = [1, 5], strides = [1, 1]} : vector<8x128xf32> to vector<1x5xf32>
    %390 = arith.addf %382, %389 : vector<1x5xf32>
    %391 = vector.broadcast %390 : vector<1x5xf32> to vector<5x5xf32>
    %392 = arith.mulf %391, %320 : vector<5x5xf32>
    %cst_60 = arith.constant dense<0.000000e+00> : vector<5xf32>
    %393 = vector.multi_reduction <add>, %392, %cst_60 [1] : vector<5x5xf32> to vector<5xf32>
    %394 = vector.shape_cast %393 : vector<5xf32> to vector<5x1xf32>
    %395 = vector.broadcast %394 : vector<5x1xf32> to vector<5x5xf32>
    %396 = arith.addf %395, %321 : vector<5x5xf32>
    %cst_61 = arith.constant dense<0xFF800000> : vector<5xf32>
    %397 = vector.multi_reduction <maximumf>, %396, %cst_61 [0] : vector<5x5xf32> to vector<5xf32>
    %398 = vector.shape_cast %397 : vector<5xf32> to vector<1x5xf32>
    %399 = vector.broadcast %398 : vector<1x5xf32> to vector<5x5xf32>
    %400 = arith.cmpf oeq, %396, %399 : vector<5x5xf32>
    %cst_62 = arith.constant 5.000000e+00 : f32
    %401 = vector.broadcast %cst_62 : f32 to vector<5x5xf32>
    %402 = arith.select %400, %315, %401 : vector<5x5xi1>, vector<5x5xf32>
    %cst_63 = arith.constant dense<0x7F800000> : vector<5xf32>
    %403 = vector.multi_reduction <minimumf>, %402, %cst_63 [0] : vector<5x5xf32> to vector<5xf32>
    %404 = vector.shape_cast %403 : vector<5xf32> to vector<1x5xf32>
    %405 = vector.extract_strided_slice %310 {offsets = [4, 0], sizes = [1, 5], strides = [1, 1]} : vector<8x128xf32> to vector<1x5xf32>
    %406 = arith.addf %398, %405 : vector<1x5xf32>
    %407 = vector.broadcast %406 : vector<1x5xf32> to vector<5x5xf32>
    %408 = arith.mulf %407, %320 : vector<5x5xf32>
    %cst_64 = arith.constant dense<0.000000e+00> : vector<5xf32>
    %409 = vector.multi_reduction <add>, %408, %cst_64 [1] : vector<5x5xf32> to vector<5xf32>
    %410 = vector.shape_cast %409 : vector<5xf32> to vector<5x1xf32>
    %411 = vector.broadcast %410 : vector<5x1xf32> to vector<5x5xf32>
    %412 = arith.addf %411, %321 : vector<5x5xf32>
    %cst_65 = arith.constant dense<0xFF800000> : vector<5xf32>
    %413 = vector.multi_reduction <maximumf>, %412, %cst_65 [0] : vector<5x5xf32> to vector<5xf32>
    %414 = vector.shape_cast %413 : vector<5xf32> to vector<1x5xf32>
    %415 = vector.broadcast %414 : vector<1x5xf32> to vector<5x5xf32>
    %416 = arith.cmpf oeq, %412, %415 : vector<5x5xf32>
    %cst_66 = arith.constant 5.000000e+00 : f32
    %417 = vector.broadcast %cst_66 : f32 to vector<5x5xf32>
    %418 = arith.select %416, %315, %417 : vector<5x5xi1>, vector<5x5xf32>
    %cst_67 = arith.constant dense<0x7F800000> : vector<5xf32>
    %419 = vector.multi_reduction <minimumf>, %418, %cst_67 [0] : vector<5x5xf32> to vector<5xf32>
    %420 = vector.shape_cast %419 : vector<5xf32> to vector<1x5xf32>
    %421 = vector.extract_strided_slice %310 {offsets = [5, 0], sizes = [1, 5], strides = [1, 1]} : vector<8x128xf32> to vector<1x5xf32>
    %422 = arith.addf %414, %421 : vector<1x5xf32>
    %423 = vector.broadcast %422 : vector<1x5xf32> to vector<5x5xf32>
    %424 = arith.mulf %423, %320 : vector<5x5xf32>
    %cst_68 = arith.constant dense<0.000000e+00> : vector<5xf32>
    %425 = vector.multi_reduction <add>, %424, %cst_68 [1] : vector<5x5xf32> to vector<5xf32>
    %426 = vector.shape_cast %425 : vector<5xf32> to vector<5x1xf32>
    %427 = vector.broadcast %426 : vector<5x1xf32> to vector<5x5xf32>
    %428 = arith.addf %427, %321 : vector<5x5xf32>
    %cst_69 = arith.constant dense<0xFF800000> : vector<5xf32>
    %429 = vector.multi_reduction <maximumf>, %428, %cst_69 [0] : vector<5x5xf32> to vector<5xf32>
    %430 = vector.shape_cast %429 : vector<5xf32> to vector<1x5xf32>
    %431 = vector.broadcast %430 : vector<1x5xf32> to vector<5x5xf32>
    %432 = arith.cmpf oeq, %428, %431 : vector<5x5xf32>
    %cst_70 = arith.constant 5.000000e+00 : f32
    %433 = vector.broadcast %cst_70 : f32 to vector<5x5xf32>
    %434 = arith.select %432, %315, %433 : vector<5x5xi1>, vector<5x5xf32>
    %cst_71 = arith.constant dense<0x7F800000> : vector<5xf32>
    %435 = vector.multi_reduction <minimumf>, %434, %cst_71 [0] : vector<5x5xf32> to vector<5xf32>
    %436 = vector.shape_cast %435 : vector<5xf32> to vector<1x5xf32>
    %437 = vector.extract_strided_slice %310 {offsets = [6, 0], sizes = [1, 5], strides = [1, 1]} : vector<8x128xf32> to vector<1x5xf32>
    %438 = arith.addf %430, %437 : vector<1x5xf32>
    %439 = vector.broadcast %438 : vector<1x5xf32> to vector<5x5xf32>
    %440 = arith.mulf %439, %320 : vector<5x5xf32>
    %cst_72 = arith.constant dense<0.000000e+00> : vector<5xf32>
    %441 = vector.multi_reduction <add>, %440, %cst_72 [1] : vector<5x5xf32> to vector<5xf32>
    %442 = vector.shape_cast %441 : vector<5xf32> to vector<5x1xf32>
    %443 = vector.broadcast %442 : vector<5x1xf32> to vector<5x5xf32>
    %444 = arith.addf %443, %321 : vector<5x5xf32>
    %cst_73 = arith.constant dense<0xFF800000> : vector<5xf32>
    %445 = vector.multi_reduction <maximumf>, %444, %cst_73 [0] : vector<5x5xf32> to vector<5xf32>
    %446 = vector.shape_cast %445 : vector<5xf32> to vector<1x5xf32>
    %447 = vector.broadcast %446 : vector<1x5xf32> to vector<5x5xf32>
    %448 = arith.cmpf oeq, %444, %447 : vector<5x5xf32>
    %cst_74 = arith.constant 5.000000e+00 : f32
    %449 = vector.broadcast %cst_74 : f32 to vector<5x5xf32>
    %450 = arith.select %448, %315, %449 : vector<5x5xi1>, vector<5x5xf32>
    %cst_75 = arith.constant dense<0x7F800000> : vector<5xf32>
    %451 = vector.multi_reduction <minimumf>, %450, %cst_75 [0] : vector<5x5xf32> to vector<5xf32>
    %452 = vector.shape_cast %451 : vector<5xf32> to vector<1x5xf32>
    %453 = vector.extract_strided_slice %310 {offsets = [7, 0], sizes = [1, 5], strides = [1, 1]} : vector<8x128xf32> to vector<1x5xf32>
    %454 = arith.addf %446, %453 : vector<1x5xf32>
    %455 = arith.addf %454, %3 : vector<1x5xf32>
    %cst_76 = arith.constant dense<0xFF800000> : vector<1xf32>
    %456 = vector.multi_reduction <maximumf>, %455, %cst_76 [1] : vector<1x5xf32> to vector<1xf32>
    %457 = vector.shape_cast %456 : vector<1xf32> to vector<1x1xf32>
    %458 = vector.broadcast %457 : vector<1x1xf32> to vector<1x5xf32>
    %459 = arith.cmpf oeq, %455, %458 : vector<1x5xf32>
    %cst_77 = arith.constant 5.000000e+00 : f32
    %460 = vector.broadcast %cst_77 : f32 to vector<1x5xf32>
    %461 = arith.select %459, %313, %460 : vector<1x5xi1>, vector<1x5xf32>
    %cst_78 = arith.constant dense<0x7F800000> : vector<1xf32>
    %462 = vector.multi_reduction <minimumf>, %461, %cst_78 [1] : vector<1x5xf32> to vector<1xf32>
    %463 = vector.shape_cast %462 : vector<1xf32> to vector<1x1xf32>
    %464 = tpu.iota {dimensions = array<i32: 1>} : vector<1x128xi32>
    %cst_79 = arith.constant 0.000000e+00 : f32
    %465 = vector.broadcast %cst_79 : f32 to vector<1x128xf32>
    %466 = vector.broadcast %463 : vector<1x1xf32> to vector<1x5xf32>
    %467 = arith.cmpf oeq, %313, %466 : vector<1x5xf32>
    %468 = arith.extui %467 : vector<1x5xi1> to vector<1x5xi32>
    %469 = arith.sitofp %468 : vector<1x5xi32> to vector<1x5xf32>
    %470 = arith.mulf %469, %313 : vector<1x5xf32>
    %cst_80 = arith.constant dense<0.000000e+00> : vector<1xf32>
    %471 = vector.multi_reduction <add>, %470, %cst_80 [1] : vector<1x5xf32> to vector<1xf32>
    %472 = vector.shape_cast %471 : vector<1xf32> to vector<1x1xf32>
    %c7_i32_81 = arith.constant 7 : i32
    %473 = vector.broadcast %c7_i32_81 : i32 to vector<1x128xi32>
    %474 = arith.cmpi eq, %464, %473 : vector<1x128xi32>
    %475 = arith.extui %474 : vector<1x128xi1> to vector<1x128xi32>
    %476 = arith.sitofp %475 : vector<1x128xi32> to vector<1x128xf32>
    %477 = vector.broadcast %472 : vector<1x1xf32> to vector<1x128xf32>
    %478 = arith.mulf %476, %477 : vector<1x128xf32>
    %479 = arith.addf %465, %478 : vector<1x128xf32>
    %480 = arith.mulf %469, %452 : vector<1x5xf32>
    %cst_82 = arith.constant dense<0.000000e+00> : vector<1xf32>
    %481 = vector.multi_reduction <add>, %480, %cst_82 [1] : vector<1x5xf32> to vector<1xf32>
    %482 = vector.shape_cast %481 : vector<1xf32> to vector<1x1xf32>
    %483 = vector.broadcast %482 : vector<1x1xf32> to vector<1x5xf32>
    %484 = arith.cmpf oeq, %313, %483 : vector<1x5xf32>
    %485 = arith.extui %484 : vector<1x5xi1> to vector<1x5xi32>
    %486 = arith.sitofp %485 : vector<1x5xi32> to vector<1x5xf32>
    %487 = arith.mulf %486, %313 : vector<1x5xf32>
    %cst_83 = arith.constant dense<0.000000e+00> : vector<1xf32>
    %488 = vector.multi_reduction <add>, %487, %cst_83 [1] : vector<1x5xf32> to vector<1xf32>
    %489 = vector.shape_cast %488 : vector<1xf32> to vector<1x1xf32>
    %c6_i32_84 = arith.constant 6 : i32
    %490 = vector.broadcast %c6_i32_84 : i32 to vector<1x128xi32>
    %491 = arith.cmpi eq, %464, %490 : vector<1x128xi32>
    %492 = arith.extui %491 : vector<1x128xi1> to vector<1x128xi32>
    %493 = arith.sitofp %492 : vector<1x128xi32> to vector<1x128xf32>
    %494 = vector.broadcast %489 : vector<1x1xf32> to vector<1x128xf32>
    %495 = arith.mulf %493, %494 : vector<1x128xf32>
    %496 = arith.addf %479, %495 : vector<1x128xf32>
    %497 = arith.mulf %486, %436 : vector<1x5xf32>
    %cst_85 = arith.constant dense<0.000000e+00> : vector<1xf32>
    %498 = vector.multi_reduction <add>, %497, %cst_85 [1] : vector<1x5xf32> to vector<1xf32>
    %499 = vector.shape_cast %498 : vector<1xf32> to vector<1x1xf32>
    %500 = vector.broadcast %499 : vector<1x1xf32> to vector<1x5xf32>
    %501 = arith.cmpf oeq, %313, %500 : vector<1x5xf32>
    %502 = arith.extui %501 : vector<1x5xi1> to vector<1x5xi32>
    %503 = arith.sitofp %502 : vector<1x5xi32> to vector<1x5xf32>
    %504 = arith.mulf %503, %313 : vector<1x5xf32>
    %cst_86 = arith.constant dense<0.000000e+00> : vector<1xf32>
    %505 = vector.multi_reduction <add>, %504, %cst_86 [1] : vector<1x5xf32> to vector<1xf32>
    %506 = vector.shape_cast %505 : vector<1xf32> to vector<1x1xf32>
    %c5_i32_87 = arith.constant 5 : i32
    %507 = vector.broadcast %c5_i32_87 : i32 to vector<1x128xi32>
    %508 = arith.cmpi eq, %464, %507 : vector<1x128xi32>
    %509 = arith.extui %508 : vector<1x128xi1> to vector<1x128xi32>
    %510 = arith.sitofp %509 : vector<1x128xi32> to vector<1x128xf32>
    %511 = vector.broadcast %506 : vector<1x1xf32> to vector<1x128xf32>
    %512 = arith.mulf %510, %511 : vector<1x128xf32>
    %513 = arith.addf %496, %512 : vector<1x128xf32>
    %514 = arith.mulf %503, %420 : vector<1x5xf32>
    %cst_88 = arith.constant dense<0.000000e+00> : vector<1xf32>
    %515 = vector.multi_reduction <add>, %514, %cst_88 [1] : vector<1x5xf32> to vector<1xf32>
    %516 = vector.shape_cast %515 : vector<1xf32> to vector<1x1xf32>
    %517 = vector.broadcast %516 : vector<1x1xf32> to vector<1x5xf32>
    %518 = arith.cmpf oeq, %313, %517 : vector<1x5xf32>
    %519 = arith.extui %518 : vector<1x5xi1> to vector<1x5xi32>
    %520 = arith.sitofp %519 : vector<1x5xi32> to vector<1x5xf32>
    %521 = arith.mulf %520, %313 : vector<1x5xf32>
    %cst_89 = arith.constant dense<0.000000e+00> : vector<1xf32>
    %522 = vector.multi_reduction <add>, %521, %cst_89 [1] : vector<1x5xf32> to vector<1xf32>
    %523 = vector.shape_cast %522 : vector<1xf32> to vector<1x1xf32>
    %c4_i32_90 = arith.constant 4 : i32
    %524 = vector.broadcast %c4_i32_90 : i32 to vector<1x128xi32>
    %525 = arith.cmpi eq, %464, %524 : vector<1x128xi32>
    %526 = arith.extui %525 : vector<1x128xi1> to vector<1x128xi32>
    %527 = arith.sitofp %526 : vector<1x128xi32> to vector<1x128xf32>
    %528 = vector.broadcast %523 : vector<1x1xf32> to vector<1x128xf32>
    %529 = arith.mulf %527, %528 : vector<1x128xf32>
    %530 = arith.addf %513, %529 : vector<1x128xf32>
    %531 = arith.mulf %520, %404 : vector<1x5xf32>
    %cst_91 = arith.constant dense<0.000000e+00> : vector<1xf32>
    %532 = vector.multi_reduction <add>, %531, %cst_91 [1] : vector<1x5xf32> to vector<1xf32>
    %533 = vector.shape_cast %532 : vector<1xf32> to vector<1x1xf32>
    %534 = vector.broadcast %533 : vector<1x1xf32> to vector<1x5xf32>
    %535 = arith.cmpf oeq, %313, %534 : vector<1x5xf32>
    %536 = arith.extui %535 : vector<1x5xi1> to vector<1x5xi32>
    %537 = arith.sitofp %536 : vector<1x5xi32> to vector<1x5xf32>
    %538 = arith.mulf %537, %313 : vector<1x5xf32>
    %cst_92 = arith.constant dense<0.000000e+00> : vector<1xf32>
    %539 = vector.multi_reduction <add>, %538, %cst_92 [1] : vector<1x5xf32> to vector<1xf32>
    %540 = vector.shape_cast %539 : vector<1xf32> to vector<1x1xf32>
    %c3_i32_93 = arith.constant 3 : i32
    %541 = vector.broadcast %c3_i32_93 : i32 to vector<1x128xi32>
    %542 = arith.cmpi eq, %464, %541 : vector<1x128xi32>
    %543 = arith.extui %542 : vector<1x128xi1> to vector<1x128xi32>
    %544 = arith.sitofp %543 : vector<1x128xi32> to vector<1x128xf32>
    %545 = vector.broadcast %540 : vector<1x1xf32> to vector<1x128xf32>
    %546 = arith.mulf %544, %545 : vector<1x128xf32>
    %547 = arith.addf %530, %546 : vector<1x128xf32>
    %548 = arith.mulf %537, %388 : vector<1x5xf32>
    %cst_94 = arith.constant dense<0.000000e+00> : vector<1xf32>
    %549 = vector.multi_reduction <add>, %548, %cst_94 [1] : vector<1x5xf32> to vector<1xf32>
    %550 = vector.shape_cast %549 : vector<1xf32> to vector<1x1xf32>
    %551 = vector.broadcast %550 : vector<1x1xf32> to vector<1x5xf32>
    %552 = arith.cmpf oeq, %313, %551 : vector<1x5xf32>
    %553 = arith.extui %552 : vector<1x5xi1> to vector<1x5xi32>
    %554 = arith.sitofp %553 : vector<1x5xi32> to vector<1x5xf32>
    %555 = arith.mulf %554, %313 : vector<1x5xf32>
    %cst_95 = arith.constant dense<0.000000e+00> : vector<1xf32>
    %556 = vector.multi_reduction <add>, %555, %cst_95 [1] : vector<1x5xf32> to vector<1xf32>
    %557 = vector.shape_cast %556 : vector<1xf32> to vector<1x1xf32>
    %c2_i32_96 = arith.constant 2 : i32
    %558 = vector.broadcast %c2_i32_96 : i32 to vector<1x128xi32>
    %559 = arith.cmpi eq, %464, %558 : vector<1x128xi32>
    %560 = arith.extui %559 : vector<1x128xi1> to vector<1x128xi32>
    %561 = arith.sitofp %560 : vector<1x128xi32> to vector<1x128xf32>
    %562 = vector.broadcast %557 : vector<1x1xf32> to vector<1x128xf32>
    %563 = arith.mulf %561, %562 : vector<1x128xf32>
    %564 = arith.addf %547, %563 : vector<1x128xf32>
    %565 = arith.mulf %554, %372 : vector<1x5xf32>
    %cst_97 = arith.constant dense<0.000000e+00> : vector<1xf32>
    %566 = vector.multi_reduction <add>, %565, %cst_97 [1] : vector<1x5xf32> to vector<1xf32>
    %567 = vector.shape_cast %566 : vector<1xf32> to vector<1x1xf32>
    %568 = vector.broadcast %567 : vector<1x1xf32> to vector<1x5xf32>
    %569 = arith.cmpf oeq, %313, %568 : vector<1x5xf32>
    %570 = arith.extui %569 : vector<1x5xi1> to vector<1x5xi32>
    %571 = arith.sitofp %570 : vector<1x5xi32> to vector<1x5xf32>
    %572 = arith.mulf %571, %313 : vector<1x5xf32>
    %cst_98 = arith.constant dense<0.000000e+00> : vector<1xf32>
    %573 = vector.multi_reduction <add>, %572, %cst_98 [1] : vector<1x5xf32> to vector<1xf32>
    %574 = vector.shape_cast %573 : vector<1xf32> to vector<1x1xf32>
    %c1_i32_99 = arith.constant 1 : i32
    %575 = vector.broadcast %c1_i32_99 : i32 to vector<1x128xi32>
    %576 = arith.cmpi eq, %464, %575 : vector<1x128xi32>
    %577 = arith.extui %576 : vector<1x128xi1> to vector<1x128xi32>
    %578 = arith.sitofp %577 : vector<1x128xi32> to vector<1x128xf32>
    %579 = vector.broadcast %574 : vector<1x1xf32> to vector<1x128xf32>
    %580 = arith.mulf %578, %579 : vector<1x128xf32>
    %581 = arith.addf %564, %580 : vector<1x128xf32>
    %582 = arith.mulf %571, %356 : vector<1x5xf32>
    %cst_100 = arith.constant dense<0.000000e+00> : vector<1xf32>
    %583 = vector.multi_reduction <add>, %582, %cst_100 [1] : vector<1x5xf32> to vector<1xf32>
    %584 = vector.shape_cast %583 : vector<1xf32> to vector<1x1xf32>
    %585 = vector.broadcast %584 : vector<1x1xf32> to vector<1x5xf32>
    %586 = arith.cmpf oeq, %313, %585 : vector<1x5xf32>
    %587 = arith.extui %586 : vector<1x5xi1> to vector<1x5xi32>
    %588 = arith.sitofp %587 : vector<1x5xi32> to vector<1x5xf32>
    %589 = arith.mulf %588, %313 : vector<1x5xf32>
    %cst_101 = arith.constant dense<0.000000e+00> : vector<1xf32>
    %590 = vector.multi_reduction <add>, %589, %cst_101 [1] : vector<1x5xf32> to vector<1xf32>
    %591 = vector.shape_cast %590 : vector<1xf32> to vector<1x1xf32>
    %c0_i32_102 = arith.constant 0 : i32
    %592 = vector.broadcast %c0_i32_102 : i32 to vector<1x128xi32>
    %593 = arith.cmpi eq, %464, %592 : vector<1x128xi32>
    %594 = arith.extui %593 : vector<1x128xi1> to vector<1x128xi32>
    %595 = arith.sitofp %594 : vector<1x128xi32> to vector<1x128xf32>
    %596 = vector.broadcast %591 : vector<1x1xf32> to vector<1x128xf32>
    %597 = arith.mulf %595, %596 : vector<1x128xf32>
    %598 = arith.addf %581, %597 : vector<1x128xf32>
    %599 = arith.mulf %588, %340 : vector<1x5xf32>
    %cst_103 = arith.constant dense<0.000000e+00> : vector<1xf32>
    %600 = vector.multi_reduction <add>, %599, %cst_103 [1] : vector<1x5xf32> to vector<1xf32>
    %601 = vector.shape_cast %600 : vector<1xf32> to vector<1x1xf32>
    %602 = vector.broadcast %601 : vector<1x1xf32> to vector<1x5xf32>
    %603 = arith.cmpf oeq, %313, %602 : vector<1x5xf32>
    %604 = arith.extui %603 : vector<1x5xi1> to vector<1x5xi32>
    %605 = arith.sitofp %604 : vector<1x5xi32> to vector<1x5xf32>
    %606 = arith.mulf %605, %313 : vector<1x5xf32>
    %cst_104 = arith.constant dense<0.000000e+00> : vector<1xf32>
    %607 = vector.multi_reduction <add>, %606, %cst_104 [1] : vector<1x5xf32> to vector<1xf32>
    %608 = vector.shape_cast %607 : vector<1xf32> to vector<1x1xf32>
    %c8_i32 = arith.constant 8 : i32
    %609 = vector.broadcast %c8_i32 : i32 to vector<1x128xi32>
    %610 = arith.cmpi eq, %464, %609 : vector<1x128xi32>
    %611 = arith.extui %610 : vector<1x128xi1> to vector<1x128xi32>
    %612 = arith.sitofp %611 : vector<1x128xi32> to vector<1x128xf32>
    %613 = vector.broadcast %457 : vector<1x1xf32> to vector<1x128xf32>
    %614 = arith.mulf %612, %613 : vector<1x128xf32>
    %615 = arith.addf %598, %614 : vector<1x128xf32>
    %c9_i32 = arith.constant 9 : i32
    %616 = vector.broadcast %c9_i32 : i32 to vector<1x128xi32>
    %617 = arith.cmpi eq, %464, %616 : vector<1x128xi32>
    %618 = arith.extui %617 : vector<1x128xi1> to vector<1x128xi32>
    %619 = arith.sitofp %618 : vector<1x128xi32> to vector<1x128xf32>
    %620 = vector.broadcast %608 : vector<1x1xf32> to vector<1x128xf32>
    %621 = arith.mulf %619, %620 : vector<1x128xf32>
    %622 = arith.addf %615, %621 : vector<1x128xf32>
    %c0_105 = arith.constant 0 : index
    %c0_106 = arith.constant 0 : index
    %623 = vector.load %arg7[%c0_105, %c0_106] : memref<1x128xf32, #tpu.memory_space<vmem>>, vector<1x128xf32>
    tpu.vector_store %arg7[%c0_105, %c0_106], %622 {strides = array<i32>} : memref<1x128xf32, #tpu.memory_space<vmem>>, vector<1x128xf32>,
    return
  }
}

</mosaic_0001>

<llo_original>
// kernel: _bilstm_crf_forward.1
$region0: #{_bilstm_crf_forward.1}
  #allocation0 [shape = 'u32[]', space=smem, size = 0x4, offset = 0x4, fixed_abs, tag = 'smem constant byte address 0x4 - core index']
  #allocation1 [shape = 'u32[144,128]{1,0:T(1,128)}', space=vmem, size = 0x12000, scoped, tag = 'internal scratch']
  %s0 = inlined_call_operand.vmem [shape: f32[8,64], index: 0, kind: input, shape index: {}]
  %s1 = inlined_call_operand.vmem [shape: f32[64,128], index: 1, kind: input, shape index: {}]
  %s2 = inlined_call_operand.vmem [shape: f32[32,128], index: 2, kind: input, shape index: {}]
  %s3 = inlined_call_operand.vmem [shape: f32[32,128], index: 3, kind: input, shape index: {}]
  %s4 = inlined_call_operand.vmem [shape: f32[5,5], index: 4, kind: input, shape index: {}]
  %s5 = inlined_call_operand.vmem [shape: f32[4,128], index: 5, kind: input, shape index: {}]
  %s6 = inlined_call_operand.hbm [shape: f32[8,128], index: 6, kind: output, shape index: {0}]
  %s7 = inlined_call_operand.vmem [shape: f32[1,128], index: 7, kind: output, shape index: {1}]
  %8 = xla_tuple %s6, %s7
  %s9 = sld [smem:[#allocation0]]
  $region42: #{_bilstm_crf_forward.1} parent=0
    _
  %s11 = ssub.s32 1, %s9
  %s12 = scalar_select 0, %s11, %s9
  $region1: #{_bilstm_crf_forward.1} parent=0
    #allocation2 [shape = 'u8[4096]{0}', space=vmem, size = 0x1000, scoped, tag = 'output window, operand 0, single buffered']
    #allocation3 [shape = 's32[1]{0}', space=sflag, size = 0x4, scoped, tag = 'scoped memory for _bilstm_crf_forward.1']
    %13 = vsyncpa [#allocation3], 0
    // Predicated region
    $region2: #{_bilstm_crf_forward.1} parent=1 // pred_check
      _
    $region3: #{_bilstm_crf_forward.1} parent=1 // pred_check_branch
      %15 = sbr.rel (0) target = $region5
    $region4: #{_bilstm_crf_forward.1} parent=1 // pred_region
      _
    $region5: #{_bilstm_crf_forward.1} parent=1 // pred_fallthru
      _
    // Predicated region
    $region6: #{_bilstm_crf_forward.1} parent=1 // pred_check
      _
    $region7: #{_bilstm_crf_forward.1} parent=1 // pred_check_branch
      %17 = sbr.rel (0) target = $region9
    $region8: #{_bilstm_crf_forward.1} parent=1 // pred_region
      _
    $region9: #{_bilstm_crf_forward.1} parent=1 // pred_fallthru
      _
    // Predicated region
    $region10: #{_bilstm_crf_forward.1} parent=1 // pred_check
      _
    $region11: #{_bilstm_crf_forward.1} parent=1 // pred_check_branch
      %19 = sbr.rel (0) target = $region13
    $region12: #{_bilstm_crf_forward.1} parent=1 // pred_region
      _
    $region13: #{_bilstm_crf_forward.1} parent=1 // pred_fallthru
      _
    // Predicated region
    $region14: #{_bilstm_crf_forward.1} parent=1 // pred_check
      _
    $region15: #{_bilstm_crf_forward.1} parent=1 // pred_check_branch
      %21 = sbr.rel (0) target = $region17
    $region16: #{_bilstm_crf_forward.1} parent=1 // pred_region
      _
    $region17: #{_bilstm_crf_forward.1} parent=1 // pred_fallthru
      _
    // Predicated region
    $region18: #{_bilstm_crf_forward.1} parent=1 // pred_check
      _
    $region19: #{_bilstm_crf_forward.1} parent=1 // pred_check_branch
      %23 = sbr.rel (0) target = $region21
    $region20: #{_bilstm_crf_forward.1} parent=1 // pred_region
      _
    $region21: #{_bilstm_crf_forward.1} parent=1 // pred_fallthru
      _
    // Predicated region
    $region22: #{_bilstm_crf_forward.1} parent=1 // pred_check
      _
    $region23: #{_bilstm_crf_forward.1} parent=1 // pred_check_branch
      %25 = sbr.rel (0) target = $region25
    $region24: #{_bilstm_crf_forward.1} parent=1 // pred_region
      _
    $region25: #{_bilstm_crf_forward.1} parent=1 // pred_fallthru
      _
    %v26 = vld [vmem:[%s5] sm:$0xf]
    %v27 = vld [vmem:[%s0] sm:$0xff]
    %v28 = vld [vmem:[%s1] sm:$0xff]
    %v29 = vld [vmem:[%s1 + $0x8] sm:$0xff]
    %v30 = vld [vmem:[%s1 + $0x10] sm:$0xff]
    %v31 = vld [vmem:[%s1 + $0x18] sm:$0xff]
    %v32 = vld [vmem:[%s1 + $0x20] sm:$0xff]
    %v33 = vld [vmem:[%s1 + $0x28] sm:$0xff]
    %v34 = vld [vmem:[%s1 + $0x30] sm:$0xff]
    %v35 = vld [vmem:[%s1 + $0x38] sm:$0xff]
    %v36 = vlaneseq
    %v37 = vshrl.u32 %v36, 7
    %v38 = vsub.s32 2, %v37
    %v39 = vrot.slane %v26, %v38
    %vm40 = vcmask 523264
    %v42 = vsel %vm40, %v27, 0
    %44 = vmatprep.subr.mxu0 0.0
    %45 = vmatpush1.msra.mxu0 0.0
    %46 = vmatprep.subr.mxu0 0.0
    %47 = vmatpush1.msra.mxu0 0.0
    %48 = vmatprep.subr.mxu0 0.0
    %49 = vmatpush1.msra.mxu0 0.0
    %50 = vmatprep.subr.mxu0 0.0
    %51 = vmatpush1.msra.mxu0 0.0
    %52 = vmatprep.subr.mxu0 0.0
    %53 = vmatpush1.msra.mxu0 0.0
    %54 = vmatprep.subr.mxu0 0.0
    %55 = vmatpush1.msra.mxu0 0.0
    %56 = vmatprep.subr.mxu0 0.0
    %57 = vmatpush1.msra.mxu0 0.0
    %58 = vmatprep.subr.mxu0 0.0
    %59 = vmatpush1.msra.mxu0 0.0
    %60 = vmatprep.subr.mxu0 0.0
    %61 = vmatpush1.msra.mxu0 %v35
    %62 = vmatprep.subr.mxu0 0.0
    %63 = vmatpush1.msra.mxu0 %v34
    %64 = vmatprep.subr.mxu0 0.0
    %65 = vmatpush1.msra.mxu0 %v33
    %66 = vmatprep.subr.mxu0 0.0
    %67 = vmatpush1.msra.mxu0 %v32
    %68 = vmatprep.subr.mxu0 0.0
    %69 = vmatpush1.msra.mxu0 %v31
    %70 = vmatprep.subr.mxu0 0.0
    %71 = vmatpush1.msra.mxu0 %v30
    %72 = vmatprep.subr.mxu0 0.0
    %73 = vmatpush1.msra.mxu0 %v29
    %74 = vmatprep.subr.mxu0 0.0
    %75 = vmatpush1.msra.mxu0 %v28
    %76 = vmatprep.subr.mxu0 0.0
    %77 = vmatpush2.msra.mxu0 0.0
    %78 = vmatprep.subr.mxu0 0.0
    %79 = vmatpush2.msra.mxu0 0.0
    %80 = vmatprep.subr.mxu0 0.0
    %81 = vmatpush2.msra.mxu0 0.0
    %82 = vmatprep.subr.mxu0 0.0
    %83 = vmatpush2.msra.mxu0 0.0
    %84 = vmatprep.subr.mxu0 0.0
    %85 = vmatpush2.msra.mxu0 0.0
    %86 = vmatprep.subr.mxu0 0.0
    %87 = vmatpush2.msra.mxu0 0.0
    %88 = vmatprep.subr.mxu0 0.0
    %89 = vmatpush2.msra.mxu0 0.0
    %90 = vmatprep.subr.mxu0 0.0
    %91 = vmatpush2.msra.mxu0 0.0
    %92 = vmatprep.subr.mxu0 0.0
    %93 = vmatpush2.msra.mxu0 0.0
    %94 = vmatprep.subr.mxu0 0.0
    %95 = vmatpush2.msra.mxu0 0.0
    %96 = vmatprep.subr.mxu0 0.0
    %97 = vmatpush2.msra.mxu0 0.0
    %98 = vmatprep.subr.mxu0 0.0
    %99 = vmatpush2.msra.mxu0 0.0
    %100 = vmatprep.subr.mxu0 0.0
    %101 = vmatpush2.msra.mxu0 0.0
    %102 = vmatprep.subr.mxu0 0.0
    %103 = vmatpush2.msra.mxu0 0.0
    %104 = vmatprep.subr.mxu0 0.0
    %105 = vmatpush2.msra.mxu0 0.0
    %106 = vmatprep.subr.mxu0 0.0
    %107 = vmatpush2.msra.mxu0 0.0
    %108 = vmatprep.mubr.f32.mxu0 0.0
    %109 = vmatmul.mubr.f32.gmra.mxu0 %v42
    %v110 = vpop.f32.mrf.mxu0
    %v111 = vadd.f32 %v39, %v110
    %v112 = vpop.f32.mrf.mxu0
    %113 = vdwg.mxu0
    %v114 = vld [vmem:[%s2] sm:$0xff]
    %v115 = vld [vmem:[%s2 + $0x8] sm:$0xff]
    %v116 = vld [vmem:[%s2 + $0x10] sm:$0xff]
    %v117 = vld [vmem:[%s2 + $0x18] sm:$0xff]
    %v118 = vlaneseq
    %v119 = vshrl.u32 %v118, 7
    %vm120 = vcmask 261120
    %v122 = vsel %vm120, %v26, 0
    %124 = vmatprep.subr.mxu0 0.0
    %125 = vmatpush1.msra.mxu0 0.0
    %126 = vmatprep.subr.mxu0 0.0
    %127 = vmatpush1.msra.mxu0 0.0
    %128 = vmatprep.subr.mxu0 0.0
    %129 = vmatpush1.msra.mxu0 0.0
    %130 = vmatprep.subr.mxu0 0.0
    %131 = vmatpush1.msra.mxu0 0.0
    %132 = vmatprep.subr.mxu0 0.0
    %133 = vmatpush1.msra.mxu0 0.0
    %134 = vmatprep.subr.mxu0 0.0
    %135 = vmatpush1.msra.mxu0 0.0
    %136 = vmatprep.subr.mxu0 0.0
    %137 = vmatpush1.msra.mxu0 0.0
    %138 = vmatprep.subr.mxu0 0.0
    %139 = vmatpush1.msra.mxu0 0.0
    %140 = vmatprep.subr.mxu0 0.0
    %141 = vmatpush1.msra.mxu0 0.0
    %142 = vmatprep.subr.mxu0 0.0
    %143 = vmatpush1.msra.mxu0 0.0
    %144 = vmatprep.subr.mxu0 0.0
    %145 = vmatpush1.msra.mxu0 0.0
    %146 = vmatprep.subr.mxu0 0.0
    %147 = vmatpush1.msra.mxu0 0.0
    %148 = vmatprep.subr.mxu0 0.0
    %149 = vmatpush1.msra.mxu0 %v117
    %150 = vmatprep.subr.mxu0 0.0
    %151 = vmatpush1.msra.mxu0 %v116
    %152 = vmatprep.subr.mxu0 0.0
    %153 = vmatpush1.msra.mxu0 %v115
    %154 = vmatprep.subr.mxu0 0.0
    %155 = vmatpush1.msra.mxu0 %v114
    %156 = vmatprep.subr.mxu0 0.0
    %157 = vmatpush2.msra.mxu0 0.0
    %158 = vmatprep.subr.mxu0 0.0
    %159 = vmatpush2.msra.mxu0 0.0
    %160 = vmatprep.subr.mxu0 0.0
    %161 = vmatpush2.msra.mxu0 0.0
    %162 = vmatprep.subr.mxu0 0.0
    %163 = vmatpush2.msra.mxu0 0.0
    %164 = vmatprep.subr.mxu0 0.0
    %165 = vmatpush2.msra.mxu0 0.0
    %166 = vmatprep.subr.mxu0 0.0
    %167 = vmatpush2.msra.mxu0 0.0
    %168 = vmatprep.subr.mxu0 0.0
    %169 = vmatpush2.msra.mxu0 0.0
    %170 = vmatprep.subr.mxu0 0.0
    %171 = vmatpush2.msra.mxu0 0.0
    %172 = vmatprep.subr.mxu0 0.0
    %173 = vmatpush2.msra.mxu0 0.0
    %174 = vmatprep.subr.mxu0 0.0
    %175 = vmatpush2.msra.mxu0 0.0
    %176 = vmatprep.subr.mxu0 0.0
    %177 = vmatpush2.msra.mxu0 0.0
    %178 = vmatprep.subr.mxu0 0.0
    %179 = vmatpush2.msra.mxu0 0.0
    %180 = vmatprep.subr.mxu0 0.0
    %181 = vmatpush2.msra.mxu0 0.0
    %182 = vmatprep.subr.mxu0 0.0
    %183 = vmatpush2.msra.mxu0 0.0
    %184 = vmatprep.subr.mxu0 0.0
    %185 = vmatpush2.msra.mxu0 0.0
    %186 = vmatprep.subr.mxu0 0.0
    %187 = vmatpush2.msra.mxu0 0.0
    %188 = vmatprep.mubr.f32.mxu0 0.0
    %189 = vmatmul.mubr.f32.gmra.mxu0 %v122
    %v190 = vpop.f32.mrf.mxu0
    %v191 = vadd.f32 0.0, %v190
    %v192 = vpop.f32.mrf.mxu0
    %193 = vdwg.mxu0
    %v194 = vadd.f32 %v111, %v191
    %v195 = vxor.u32 %v194, 2147483648
    %v196 = vmul.f32 %v195, 1.442695
    %v197 = vpow.pop %v196
    %v198 = vadd.f32 %v197, 1.0
    %v199 = vrcp.pop %v198
    %v200 = vmul.f32 1.0, %v199
    %v201 = vtanh.pop %v194
    %v202 = vmul.f32 %v200, %v26
    %204 = vrot.lane.b32.xlu0 %v201, 64
    %v205 = vpop.permute.xlu0 %204
    %v207 = vmul.f32 %v200, %v205
    %209 = vrot.lane.b32.xlu0 %v207, 32
    %v210 = vpop.permute.xlu0 %209
    %v212 = vadd.f32 %v202, %v210
    %v213 = vtanh.pop %v212
    %215 = vrot.lane.b32.xlu0 %v213, 64
    %v216 = vpop.permute.xlu0 %215
    %v218 = vmul.f32 %v200, %v216
    %vm219 = vcmp.eq.s32.totalorder %v119, 0
    %v220 = vsel %vm219, 1, 0
    %v221 = vcvt.s32.f32 %v220
    %v222 = vlaneseq
    %v223 = vshrl.u32 %v222, 7
    %v224 = vsub.s32 0, %v223
    %v225 = vrot.slane %v218, %v224
    %v226 = vmul.f32 %v221, %v225
    %v227 = vadd.f32 %v226, 0.0
    %vm228 = vcmp.eq.s32.totalorder %v119, 7
    %v229 = vsel %vm228, 1, 0
    %v230 = vcvt.s32.f32 %v229
    %v231 = vmul.f32 %v230, %v225
    %v232 = vadd.f32 %v231, 0.0
    %234 = vrot.lane.b32.xlu0 %v218, 32
    %v235 = vpop.permute.xlu0 %234
    %v236 = vsel %vm120, %v235, 0
    %238 = vmatprep.subr.mxu0 0.0
    %239 = vmatpush1.msra.mxu0 0.0
    %240 = vmatprep.subr.mxu0 0.0
    %241 = vmatpush1.msra.mxu0 0.0
    %242 = vmatprep.subr.mxu0 0.0
    %243 = vmatpush1.msra.mxu0 0.0
    %244 = vmatprep.subr.mxu0 0.0
    %245 = vmatpush1.msra.mxu0 0.0
    %246 = vmatprep.subr.mxu0 0.0
    %247 = vmatpush1.msra.mxu0 0.0
    %248 = vmatprep.subr.mxu0 0.0
    %249 = vmatpush1.msra.mxu0 0.0
    %250 = vmatprep.subr.mxu0 0.0
    %251 = vmatpush1.msra.mxu0 0.0
    %252 = vmatprep.subr.mxu0 0.0
    %253 = vmatpush1.msra.mxu0 0.0
    %254 = vmatprep.subr.mxu0 0.0
    %255 = vmatpush1.msra.mxu0 0.0
    %256 = vmatprep.subr.mxu0 0.0
    %257 = vmatpush1.msra.mxu0 0.0
    %258 = vmatprep.subr.mxu0 0.0
    %259 = vmatpush1.msra.mxu0 0.0
    %260 = vmatprep.subr.mxu0 0.0
    %261 = vmatpush1.msra.mxu0 0.0
    %262 = vmatprep.subr.mxu0 0.0
    %263 = vmatpush1.msra.mxu0 %v117
    %264 = vmatprep.subr.mxu0 0.0
    %265 = vmatpush1.msra.mxu0 %v116
    %266 = vmatprep.subr.mxu0 0.0
    %267 = vmatpush1.msra.mxu0 %v115
    %268 = vmatprep.subr.mxu0 0.0
    %269 = vmatpush1.msra.mxu0 %v114
    %270 = vmatprep.subr.mxu0 0.0
    %271 = vmatpush2.msra.mxu0 0.0
    %272 = vmatprep.subr.mxu0 0.0
    %273 = vmatpush2.msra.mxu0 0.0
    %274 = vmatprep.subr.mxu0 0.0
    %275 = vmatpush2.msra.mxu0 0.0
    %276 = vmatprep.subr.mxu0 0.0
    %277 = vmatpush2.msra.mxu0 0.0
    %278 = vmatprep.subr.mxu0 0.0
    %279 = vmatpush2.msra.mxu0 0.0
    %280 = vmatprep.subr.mxu0 0.0
    %281 = vmatpush2.msra.mxu0 0.0
    %282 = vmatprep.subr.mxu0 0.0
    %283 = vmatpush2.msra.mxu0 0.0
    %284 = vmatprep.subr.mxu0 0.0
    %285 = vmatpush2.msra.mxu0 0.0
    %286 = vmatprep.subr.mxu0 0.0
    %287 = vmatpush2.msra.mxu0 0.0
    %288 = vmatprep.subr.mxu0 0.0
    %289 = vmatpush2.msra.mxu0 0.0
    %290 = vmatprep.subr.mxu0 0.0
    %291 = vmatpush2.msra.mxu0 0.0
    %292 = vmatprep.subr.mxu0 0.0
    %293 = vmatpush2.msra.mxu0 0.0
    %294 = vmatprep.subr.mxu0 0.0
    %295 = vmatpush2.msra.mxu0 0.0
    %296 = vmatprep.subr.mxu0 0.0
    %297 = vmatpush2.msra.mxu0 0.0
    %298 = vmatprep.subr.mxu0 0.0
    %299 = vmatpush2.msra.mxu0 0.0
    %300 = vmatprep.subr.mxu0 0.0
    %301 = vmatpush2.msra.mxu0 0.0
    %302 = vmatprep.mubr.f32.mxu0 0.0
    %303 = vmatmul.mubr.f32.gmra.mxu0 %v236
    %v304 = vpop.f32.mrf.mxu0
    %v305 = vadd.f32 0.0, %v304
    %v306 = vpop.f32.mrf.mxu0
    %307 = vdwg.mxu0
    %v309 = vrot.slane %v305, 7
    %v311 = vadd.f32 %v111, %v309
    %v312 = vxor.u32 %v311, 2147483648
    %v313 = vmul.f32 %v312, 1.442695
    %v314 = vpow.pop %v313
    %v315 = vadd.f32 %v314, 1.0
    %v316 = vrcp.pop %v315
    %v317 = vmul.f32 1.0, %v316
    %v318 = vtanh.pop %v311
    %v320 = vrot.slane %v212, 7
    %v322 = vmul.f32 %v317, %v320
    %324 = vrot.lane.b32.xlu0 %v318, 64
    %v325 = vpop.permute.xlu0 %324
    %v327 = vmul.f32 %v317, %v325
    %329 = vrot.lane.b32.xlu0 %v327, 32
    %v330 = vpop.permute.xlu0 %329
    %v332 = vadd.f32 %v322, %v330
    %v333 = vtanh.pop %v332
    %335 = vrot.lane.b32.xlu0 %v333, 64
    %v336 = vpop.permute.xlu0 %335
    %v338 = vmul.f32 %v317, %v336
    %vm339 = vcmp.eq.s32.totalorder %v119, 1
    %v340 = vsel %vm339, 1, 0
    %v341 = vcvt.s32.f32 %v340
    %v342 = vlaneseq
    %v343 = vshrl.u32 %v342, 7
    %v344 = vsub.s32 1, %v343
    %v345 = vrot.slane %v338, %v344
    %v346 = vmul.f32 %v341, %v345
    %v347 = vadd.f32 %v227, %v346
    %vm348 = vcmp.eq.s32.totalorder %v119, 6
    %v349 = vsel %vm348, 1, 0
    %v350 = vcvt.s32.f32 %v349
    %v351 = vmul.f32 %v350, %v345
    %v352 = vadd.f32 %v232, %v351
    %v354 = vrot.slane %v338, 1
    %355 = vrot.lane.b32.xlu0 %v354, 32
    %v356 = vpop.permute.xlu0 %355
    %v357 = vsel %vm120, %v356, 0
    %359 = vmatprep.subr.mxu0 0.0
    %360 = vmatpush1.msra.mxu0 0.0
    %361 = vmatprep.subr.mxu0 0.0
    %362 = vmatpush1.msra.mxu0 0.0
    %363 = vmatprep.subr.mxu0 0.0
    %364 = vmatpush1.msra.mxu0 0.0
    %365 = vmatprep.subr.mxu0 0.0
    %366 = vmatpush1.msra.mxu0 0.0
    %367 = vmatprep.subr.mxu0 0.0
    %368 = vmatpush1.msra.mxu0 0.0
    %369 = vmatprep.subr.mxu0 0.0
    %370 = vmatpush1.msra.mxu0 0.0
    %371 = vmatprep.subr.mxu0 0.0
    %372 = vmatpush1.msra.mxu0 0.0
    %373 = vmatprep.subr.mxu0 0.0
    %374 = vmatpush1.msra.mxu0 0.0
    %375 = vmatprep.subr.mxu0 0.0
    %376 = vmatpush1.msra.mxu0 0.0
    %377 = vmatprep.subr.mxu0 0.0
    %378 = vmatpush1.msra.mxu0 0.0
    %379 = vmatprep.subr.mxu0 0.0
    %380 = vmatpush1.msra.mxu0 0.0
    %381 = vmatprep.subr.mxu0 0.0
    %382 = vmatpush1.msra.mxu0 0.0
    %383 = vmatprep.subr.mxu0 0.0
    %384 = vmatpush1.msra.mxu0 %v117
    %385 = vmatprep.subr.mxu0 0.0
    %386 = vmatpush1.msra.mxu0 %v116
    %387 = vmatprep.subr.mxu0 0.0
    %388 = vmatpush1.msra.mxu0 %v115
    %389 = vmatprep.subr.mxu0 0.0
    %390 = vmatpush1.msra.mxu0 %v114
    %391 = vmatprep.subr.mxu0 0.0
    %392 = vmatpush2.msra.mxu0 0.0
    %393 = vmatprep.subr.mxu0 0.0
    %394 = vmatpush2.msra.mxu0 0.0
    %395 = vmatprep.subr.mxu0 0.0
    %396 = vmatpush2.msra.mxu0 0.0
    %397 = vmatprep.subr.mxu0 0.0
    %398 = vmatpush2.msra.mxu0 0.0
    %399 = vmatprep.subr.mxu0 0.0
    %400 = vmatpush2.msra.mxu0 0.0
    %401 = vmatprep.subr.mxu0 0.0
    %402 = vmatpush2.msra.mxu0 0.0
    %403 = vmatprep.subr.mxu0 0.0
    %404 = vmatpush2.msra.mxu0 0.0
    %405 = vmatprep.subr.mxu0 0.0
    %406 = vmatpush2.msra.mxu0 0.0
    %407 = vmatprep.subr.mxu0 0.0
    %408 = vmatpush2.msra.mxu0 0.0
    %409 = vmatprep.subr.mxu0 0.0
    %410 = vmatpush2.msra.mxu0 0.0
    %411 = vmatprep.subr.mxu0 0.0
    %412 = vmatpush2.msra.mxu0 0.0
    %413 = vmatprep.subr.mxu0 0.0
    %414 = vmatpush2.msra.mxu0 0.0
    %415 = vmatprep.subr.mxu0 0.0
    %416 = vmatpush2.msra.mxu0 0.0
    %417 = vmatprep.subr.mxu0 0.0
    %418 = vmatpush2.msra.mxu0 0.0
    %419 = vmatprep.subr.mxu0 0.0
    %420 = vmatpush2.msra.mxu0 0.0
    %421 = vmatprep.subr.mxu0 0.0
    %422 = vmatpush2.msra.mxu0 0.0
    %423 = vmatprep.mubr.f32.mxu0 0.0
    %424 = vmatmul.mubr.f32.gmra.mxu0 %v357
    %v425 = vpop.f32.mrf.mxu0
    %v426 = vadd.f32 0.0, %v425
    %v427 = vpop.f32.mrf.mxu0
    %428 = vdwg.mxu0
    %v430 = vrot.slane %v426, 6
    %v432 = vadd.f32 %v111, %v430
    %v433 = vxor.u32 %v432, 2147483648
    %v434 = vmul.f32 %v433, 1.442695
    %v435 = vpow.pop %v434
    %v436 = vadd.f32 %v435, 1.0
    %v437 = vrcp.pop %v436
    %v438 = vmul.f32 1.0, %v437
    %v439 = vtanh.pop %v432
    %v441 = vrot.slane %v332, 7
    %v443 = vmul.f32 %v438, %v441
    %445 = vrot.lane.b32.xlu0 %v439, 64
    %v446 = vpop.permute.xlu0 %445
    %v448 = vmul.f32 %v438, %v446
    %450 = vrot.lane.b32.xlu0 %v448, 32
    %v451 = vpop.permute.xlu0 %450
    %v453 = vadd.f32 %v443, %v451
    %v454 = vtanh.pop %v453
    %456 = vrot.lane.b32.xlu0 %v454, 64
    %v457 = vpop.permute.xlu0 %456
    %v459 = vmul.f32 %v438, %v457
    %vm460 = vcmp.eq.s32.totalorder %v119, 2
    %v461 = vsel %vm460, 1, 0
    %v462 = vcvt.s32.f32 %v461
    %v463 = vlaneseq
    %v464 = vshrl.u32 %v463, 7
    %v465 = vsub.s32 2, %v464
    %v466 = vrot.slane %v459, %v465
    %v467 = vmul.f32 %v462, %v466
    %v468 = vadd.f32 %v347, %v467
    %vm469 = vcmp.eq.s32.totalorder %v119, 5
    %v470 = vsel %vm469, 1, 0
    %v471 = vcvt.s32.f32 %v470
    %v472 = vmul.f32 %v471, %v466
    %v473 = vadd.f32 %v352, %v472
    %v475 = vrot.slane %v459, 2
    %476 = vrot.lane.b32.xlu0 %v475, 32
    %v477 = vpop.permute.xlu0 %476
    %v478 = vsel %vm120, %v477, 0
    %480 = vmatprep.subr.mxu0 0.0
    %481 = vmatpush1.msra.mxu0 0.0
    %482 = vmatprep.subr.mxu0 0.0
    %483 = vmatpush1.msra.mxu0 0.0
    %484 = vmatprep.subr.mxu0 0.0
    %485 = vmatpush1.msra.mxu0 0.0
    %486 = vmatprep.subr.mxu0 0.0
    %487 = vmatpush1.msra.mxu0 0.0
    %488 = vmatprep.subr.mxu0 0.0
    %489 = vmatpush1.msra.mxu0 0.0
    %490 = vmatprep.subr.mxu0 0.0
    %491 = vmatpush1.msra.mxu0 0.0
    %492 = vmatprep.subr.mxu0 0.0
    %493 = vmatpush1.msra.mxu0 0.0
    %494 = vmatprep.subr.mxu0 0.0
    %495 = vmatpush1.msra.mxu0 0.0
    %496 = vmatprep.subr.mxu0 0.0
    %497 = vmatpush1.msra.mxu0 0.0
    %498 = vmatprep.subr.mxu0 0.0
    %499 = vmatpush1.msra.mxu0 0.0
    %500 = vmatprep.subr.mxu0 0.0
    %501 = vmatpush1.msra.mxu0 0.0
    %502 = vmatprep.subr.mxu0 0.0
    %503 = vmatpush1.msra.mxu0 0.0
    %504 = vmatprep.subr.mxu0 0.0
    %505 = vmatpush1.msra.mxu0 %v117
    %506 = vmatprep.subr.mxu0 0.0
    %507 = vmatpush1.msra.mxu0 %v116
    %508 = vmatprep.subr.mxu0 0.0
    %509 = vmatpush1.msra.mxu0 %v115
    %510 = vmatprep.subr.mxu0 0.0
    %511 = vmatpush1.msra.mxu0 %v114
    %512 = vmatprep.subr.mxu0 0.0
    %513 = vmatpush2.msra.mxu0 0.0
    %514 = vmatprep.subr.mxu0 0.0
    %515 = vmatpush2.msra.mxu0 0.0
    %516 = vmatprep.subr.mxu0 0.0
    %517 = vmatpush2.msra.mxu0 0.0
    %518 = vmatprep.subr.mxu0 0.0
    %519 = vmatpush2.msra.mxu0 0.0
    %520 = vmatprep.subr.mxu0 0.0
    %521 = vmatpush2.msra.mxu0 0.0
    %522 = vmatprep.subr.mxu0 0.0
    %523 = vmatpush2.msra.mxu0 0.0
    %524 = vmatprep.subr.mxu0 0.0
    %525 = vmatpush2.msra.mxu0 0.0
    %526 = vmatprep.subr.mxu0 0.0
    %527 = vmatpush2.msra.mxu0 0.0
    %528 = vmatprep.subr.mxu0 0.0
    %529 = vmatpush2.msra.mxu0 0.0
    %530 = vmatprep.subr.mxu0 0.0
    %531 = vmatpush2.msra.mxu0 0.0
    %532 = vmatprep.subr.mxu0 0.0
    %533 = vmatpush2.msra.mxu0 0.0
    %534 = vmatprep.subr.mxu0 0.0
    %535 = vmatpush2.msra.mxu0 0.0
    %536 = vmatprep.subr.mxu0 0.0
    %537 = vmatpush2.msra.mxu0 0.0
    %538 = vmatprep.subr.mxu0 0.0
    %539 = vmatpush2.msra.mxu0 0.0
    %540 = vmatprep.subr.mxu0 0.0
    %541 = vmatpush2.msra.mxu0 0.0
    %542 = vmatprep.subr.mxu0 0.0
    %543 = vmatpush2.msra.mxu0 0.0
    %544 = vmatprep.mubr.f32.mxu0 0.0
    %545 = vmatmul.mubr.f32.gmra.mxu0 %v478
    %v546 = vpop.f32.mrf.mxu0
    %v547 = vadd.f32 0.0, %v546
    %v548 = vpop.f32.mrf.mxu0
    %549 = vdwg.mxu0
    %v551 = vrot.slane %v547, 5
    %v553 = vadd.f32 %v111, %v551
    %v554 = vxor.u32 %v553, 2147483648
    %v555 = vmul.f32 %v554, 1.442695
    %v556 = vpow.pop %v555
    %v557 = vadd.f32 %v556, 1.0
    %v558 = vrcp.pop %v557
    %v559 = vmul.f32 1.0, %v558
    %v560 = vtanh.pop %v553
    %v562 = vrot.slane %v453, 7
    %v564 = vmul.f32 %v559, %v562
    %566 = vrot.lane.b32.xlu0 %v560, 64
    %v567 = vpop.permute.xlu0 %566
    %v569 = vmul.f32 %v559, %v567
    %571 = vrot.lane.b32.xlu0 %v569, 32
    %v572 = vpop.permute.xlu0 %571
    %v574 = vadd.f32 %v564, %v572
    %v575 = vtanh.pop %v574
    %577 = vrot.lane.b32.xlu0 %v575, 64
    %v578 = vpop.permute.xlu0 %577
    %v580 = vmul.f32 %v559, %v578
    %vm581 = vcmp.eq.s32.totalorder %v119, 3
    %v582 = vsel %vm581, 1, 0
    %v583 = vcvt.s32.f32 %v582
    %v584 = vlaneseq
    %v585 = vshrl.u32 %v584, 7
    %v586 = vsub.s32 3, %v585
    %v587 = vrot.slane %v580, %v586
    %v588 = vmul.f32 %v583, %v587
    %v589 = vadd.f32 %v468, %v588
    %vm590 = vcmp.eq.s32.totalorder %v119, 4
    %v591 = vsel %vm590, 1, 0
    %v592 = vcvt.s32.f32 %v591
    %v593 = vmul.f32 %v592, %v587
    %v594 = vadd.f32 %v473, %v593
    %v596 = vrot.slane %v580, 3
    %597 = vrot.lane.b32.xlu0 %v596, 32
    %v598 = vpop.permute.xlu0 %597
    %v599 = vsel %vm120, %v598, 0
    %601 = vmatprep.subr.mxu0 0.0
    %602 = vmatpush1.msra.mxu0 0.0
    %603 = vmatprep.subr.mxu0 0.0
    %604 = vmatpush1.msra.mxu0 0.0
    %605 = vmatprep.subr.mxu0 0.0
    %606 = vmatpush1.msra.mxu0 0.0
    %607 = vmatprep.subr.mxu0 0.0
    %608 = vmatpush1.msra.mxu0 0.0
    %609 = vmatprep.subr.mxu0 0.0
    %610 = vmatpush1.msra.mxu0 0.0
    %611 = vmatprep.subr.mxu0 0.0
    %612 = vmatpush1.msra.mxu0 0.0
    %613 = vmatprep.subr.mxu0 0.0
    %614 = vmatpush1.msra.mxu0 0.0
    %615 = vmatprep.subr.mxu0 0.0
    %616 = vmatpush1.msra.mxu0 0.0
    %617 = vmatprep.subr.mxu0 0.0
    %618 = vmatpush1.msra.mxu0 0.0
    %619 = vmatprep.subr.mxu0 0.0
    %620 = vmatpush1.msra.mxu0 0.0
    %621 = vmatprep.subr.mxu0 0.0
    %622 = vmatpush1.msra.mxu0 0.0
    %623 = vmatprep.subr.mxu0 0.0
    %624 = vmatpush1.msra.mxu0 0.0
    %625 = vmatprep.subr.mxu0 0.0
    %626 = vmatpush1.msra.mxu0 %v117
    %627 = vmatprep.subr.mxu0 0.0
    %628 = vmatpush1.msra.mxu0 %v116
    %629 = vmatprep.subr.mxu0 0.0
    %630 = vmatpush1.msra.mxu0 %v115
    %631 = vmatprep.subr.mxu0 0.0
    %632 = vmatpush1.msra.mxu0 %v114
    %633 = vmatprep.subr.mxu0 0.0
    %634 = vmatpush2.msra.mxu0 0.0
    %635 = vmatprep.subr.mxu0 0.0
    %636 = vmatpush2.msra.mxu0 0.0
    %637 = vmatprep.subr.mxu0 0.0
    %638 = vmatpush2.msra.mxu0 0.0
    %639 = vmatprep.subr.mxu0 0.0
    %640 = vmatpush2.msra.mxu0 0.0
    %641 = vmatprep.subr.mxu0 0.0
    %642 = vmatpush2.msra.mxu0 0.0
    %643 = vmatprep.subr.mxu0 0.0
    %644 = vmatpush2.msra.mxu0 0.0
    %645 = vmatprep.subr.mxu0 0.0
    %646 = vmatpush2.msra.mxu0 0.0
    %647 = vmatprep.subr.mxu0 0.0
    %648 = vmatpush2.msra.mxu0 0.0
    %649 = vmatprep.subr.mxu0 0.0
    %650 = vmatpush2.msra.mxu0 0.0
    %651 = vmatprep.subr.mxu0 0.0
    %652 = vmatpush2.msra.mxu0 0.0
    %653 = vmatprep.subr.mxu0 0.0
    %654 = vmatpush2.msra.mxu0 0.0
    %655 = vmatprep.subr.mxu0 0.0
    %656 = vmatpush2.msra.mxu0 0.0
    %657 = vmatprep.subr.mxu0 0.0
    %658 = vmatpush2.msra.mxu0 0.0
    %659 = vmatprep.subr.mxu0 0.0
    %660 = vmatpush2.msra.mxu0 0.0
    %661 = vmatprep.subr.mxu0 0.0
    %662 = vmatpush2.msra.mxu0 0.0
    %663 = vmatprep.subr.mxu0 0.0
    %664 = vmatpush2.msra.mxu0 0.0
    %665 = vmatprep.mubr.f32.mxu0 0.0
    %666 = vmatmul.mubr.f32.gmra.mxu0 %v599
    %v667 = vpop.f32.mrf.mxu0
    %v668 = vadd.f32 0.0, %v667
    %v669 = vpop.f32.mrf.mxu0
    %670 = vdwg.mxu0
    %v672 = vrot.slane %v668, 4
    %v674 = vadd.f32 %v111, %v672
    %v675 = vxor.u32 %v674, 2147483648
    %v676 = vmul.f32 %v675, 1.442695
    %v677 = vpow.pop %v676
    %v678 = vadd.f32 %v677, 1.0
    %v679 = vrcp.pop %v678
    %v680 = vmul.f32 1.0, %v679
    %v681 = vtanh.pop %v674
    %v683 = vrot.slane %v574, 7
    %v685 = vmul.f32 %v680, %v683
    %687 = vrot.lane.b32.xlu0 %v681, 64
    %v688 = vpop.permute.xlu0 %687
    %v690 = vmul.f32 %v680, %v688
    %692 = vrot.lane.b32.xlu0 %v690, 32
    %v693 = vpop.permute.xlu0 %692
    %v695 = vadd.f32 %v685, %v693
    %v696 = vtanh.pop %v695
    %698 = vrot.lane.b32.xlu0 %v696, 64
    %v699 = vpop.permute.xlu0 %698
    %v701 = vmul.f32 %v680, %v699
    %v702 = vlaneseq
    %v703 = vshrl.u32 %v702, 7
    %v704 = vsub.s32 4, %v703
    %v705 = vrot.slane %v701, %v704
    %v706 = vmul.f32 %v592, %v705
    %v707 = vadd.f32 %v589, %v706
    %v708 = vmul.f32 %v583, %v705
    %v709 = vadd.f32 %v594, %v708
    %v711 = vrot.slane %v701, 4
    %712 = vrot.lane.b32.xlu0 %v711, 32
    %v713 = vpop.permute.xlu0 %712
    %v714 = vsel %vm120, %v713, 0
    %716 = vmatprep.subr.mxu0 0.0
    %717 = vmatpush1.msra.mxu0 0.0
    %718 = vmatprep.subr.mxu0 0.0
    %719 = vmatpush1.msra.mxu0 0.0
    %720 = vmatprep.subr.mxu0 0.0
    %721 = vmatpush1.msra.mxu0 0.0
    %722 = vmatprep.subr.mxu0 0.0
    %723 = vmatpush1.msra.mxu0 0.0
    %724 = vmatprep.subr.mxu0 0.0
    %725 = vmatpush1.msra.mxu0 0.0
    %726 = vmatprep.subr.mxu0 0.0
    %727 = vmatpush1.msra.mxu0 0.0
    %728 = vmatprep.subr.mxu0 0.0
    %729 = vmatpush1.msra.mxu0 0.0
    %730 = vmatprep.subr.mxu0 0.0
    %731 = vmatpush1.msra.mxu0 0.0
    %732 = vmatprep.subr.mxu0 0.0
    %733 = vmatpush1.msra.mxu0 0.0
    %734 = vmatprep.subr.mxu0 0.0
    %735 = vmatpush1.msra.mxu0 0.0
    %736 = vmatprep.subr.mxu0 0.0
    %737 = vmatpush1.msra.mxu0 0.0
    %738 = vmatprep.subr.mxu0 0.0
    %739 = vmatpush1.msra.mxu0 0.0
    %740 = vmatprep.subr.mxu0 0.0
    %741 = vmatpush1.msra.mxu0 %v117
    %742 = vmatprep.subr.mxu0 0.0
    %743 = vmatpush1.msra.mxu0 %v116
    %744 = vmatprep.subr.mxu0 0.0
    %745 = vmatpush1.msra.mxu0 %v115
    %746 = vmatprep.subr.mxu0 0.0
    %747 = vmatpush1.msra.mxu0 %v114
    %748 = vmatprep.subr.mxu0 0.0
    %749 = vmatpush2.msra.mxu0 0.0
    %750 = vmatprep.subr.mxu0 0.0
    %751 = vmatpush2.msra.mxu0 0.0
    %752 = vmatprep.subr.mxu0 0.0
    %753 = vmatpush2.msra.mxu0 0.0
    %754 = vmatprep.subr.mxu0 0.0
    %755 = vmatpush2.msra.mxu0 0.0
    %756 = vmatprep.subr.mxu0 0.0
    %757 = vmatpush2.msra.mxu0 0.0
    %758 = vmatprep.subr.mxu0 0.0
    %759 = vmatpush2.msra.mxu0 0.0
    %760 = vmatprep.subr.mxu0 0.0
    %761 = vmatpush2.msra.mxu0 0.0
    %762 = vmatprep.subr.mxu0 0.0
    %763 = vmatpush2.msra.mxu0 0.0
    %764 = vmatprep.subr.mxu0 0.0
    %765 = vmatpush2.msra.mxu0 0.0
    %766 = vmatprep.subr.mxu0 0.0
    %767 = vmatpush2.msra.mxu0 0.0
    %768 = vmatprep.subr.mxu0 0.0
    %769 = vmatpush2.msra.mxu0 0.0
    %770 = vmatprep.subr.mxu0 0.0
    %771 = vmatpush2.msra.mxu0 0.0
    %772 = vmatprep.subr.mxu0 0.0
    %773 = vmatpush2.msra.mxu0 0.0
    %774 = vmatprep.subr.mxu0 0.0
    %775 = vmatpush2.msra.mxu0 0.0
    %776 = vmatprep.subr.mxu0 0.0
    %777 = vmatpush2.msra.mxu0 0.0
    %778 = vmatprep.subr.mxu0 0.0
    %779 = vmatpush2.msra.mxu0 0.0
    %780 = vmatprep.mubr.f32.mxu0 0.0
    %781 = vmatmul.mubr.f32.gmra.mxu0 %v714
    %v782 = vpop.f32.mrf.mxu0
    %v783 = vadd.f32 0.0, %v782
    %v784 = vpop.f32.mrf.mxu0
    %785 = vdwg.mxu0
    %v787 = vrot.slane %v783, 3
    %v789 = vadd.f32 %v111, %v787
    %v790 = vxor.u32 %v789, 2147483648
    %v791 = vmul.f32 %v790, 1.442695
    %v792 = vpow.pop %v791
    %v793 = vadd.f32 %v792, 1.0
    %v794 = vrcp.pop %v793
    %v795 = vmul.f32 1.0, %v794
    %v796 = vtanh.pop %v789
    %v798 = vrot.slane %v695, 7
    %v800 = vmul.f32 %v795, %v798
    %802 = vrot.lane.b32.xlu0 %v796, 64
    %v803 = vpop.permute.xlu0 %802
    %v805 = vmul.f32 %v795, %v803
    %807 = vrot.lane.b32.xlu0 %v805, 32
    %v808 = vpop.permute.xlu0 %807
    %v810 = vadd.f32 %v800, %v808
    %v811 = vtanh.pop %v810
    %813 = vrot.lane.b32.xlu0 %v811, 64
    %v814 = vpop.permute.xlu0 %813
    %v816 = vmul.f32 %v795, %v814
    %v817 = vlaneseq
    %v818 = vshrl.u32 %v817, 7
    %v819 = vsub.s32 5, %v818
    %v820 = vrot.slane %v816, %v819
    %v821 = vmul.f32 %v471, %v820
    %v822 = vadd.f32 %v707, %v821
    %v823 = vmul.f32 %v462, %v820
    %v824 = vadd.f32 %v709, %v823
    %v826 = vrot.slane %v816, 5
    %827 = vrot.lane.b32.xlu0 %v826, 32
    %v828 = vpop.permute.xlu0 %827
    %v829 = vsel %vm120, %v828, 0
    %831 = vmatprep.subr.mxu0 0.0
    %832 = vmatpush1.msra.mxu0 0.0
    %833 = vmatprep.subr.mxu0 0.0
    %834 = vmatpush1.msra.mxu0 0.0
    %835 = vmatprep.subr.mxu0 0.0
    %836 = vmatpush1.msra.mxu0 0.0
    %837 = vmatprep.subr.mxu0 0.0
    %838 = vmatpush1.msra.mxu0 0.0
    %839 = vmatprep.subr.mxu0 0.0
    %840 = vmatpush1.msra.mxu0 0.0
    %841 = vmatprep.subr.mxu0 0.0
    %842 = vmatpush1.msra.mxu0 0.0
    %843 = vmatprep.subr.mxu0 0.0
    %844 = vmatpush1.msra.mxu0 0.0
    %845 = vmatprep.subr.mxu0 0.0
    %846 = vmatpush1.msra.mxu0 0.0
    %847 = vmatprep.subr.mxu0 0.0
    %848 = vmatpush1.msra.mxu0 0.0
    %849 = vmatprep.subr.mxu0 0.0
    %850 = vmatpush1.msra.mxu0 0.0
    %851 = vmatprep.subr.mxu0 0.0
    %852 = vmatpush1.msra.mxu0 0.0
    %853 = vmatprep.subr.mxu0 0.0
    %854 = vmatpush1.msra.mxu0 0.0
    %855 = vmatprep.subr.mxu0 0.0
    %856 = vmatpush1.msra.mxu0 %v117
    %857 = vmatprep.subr.mxu0 0.0
    %858 = vmatpush1.msra.mxu0 %v116
    %859 = vmatprep.subr.mxu0 0.0
    %860 = vmatpush1.msra.mxu0 %v115
    %861 = vmatprep.subr.mxu0 0.0
    %862 = vmatpush1.msra.mxu0 %v114
    %863 = vmatprep.subr.mxu0 0.0
    %864 = vmatpush2.msra.mxu0 0.0
    %865 = vmatprep.subr.mxu0 0.0
    %866 = vmatpush2.msra.mxu0 0.0
    %867 = vmatprep.subr.mxu0 0.0
    %868 = vmatpush2.msra.mxu0 0.0
    %869 = vmatprep.subr.mxu0 0.0
    %870 = vmatpush2.msra.mxu0 0.0
    %871 = vmatprep.subr.mxu0 0.0
    %872 = vmatpush2.msra.mxu0 0.0
    %873 = vmatprep.subr.mxu0 0.0
    %874 = vmatpush2.msra.mxu0 0.0
    %875 = vmatprep.subr.mxu0 0.0
    %876 = vmatpush2.msra.mxu0 0.0
    %877 = vmatprep.subr.mxu0 0.0
    %878 = vmatpush2.msra.mxu0 0.0
    %879 = vmatprep.subr.mxu0 0.0
    %880 = vmatpush2.msra.mxu0 0.0
    %881 = vmatprep.subr.mxu0 0.0
    %882 = vmatpush2.msra.mxu0 0.0
    %883 = vmatprep.subr.mxu0 0.0
    %884 = vmatpush2.msra.mxu0 0.0
    %885 = vmatprep.subr.mxu0 0.0
    %886 = vmatpush2.msra.mxu0 0.0
    %887 = vmatprep.subr.mxu0 0.0
    %888 = vmatpush2.msra.mxu0 0.0
    %889 = vmatprep.subr.mxu0 0.0
    %890 = vmatpush2.msra.mxu0 0.0
    %891 = vmatprep.subr.mxu0 0.0
    %892 = vmatpush2.msra.mxu0 0.0
    %893 = vmatprep.subr.mxu0 0.0
    %894 = vmatpush2.msra.mxu0 0.0
    %895 = vmatprep.mubr.f32.mxu0 0.0
    %896 = vmatmul.mubr.f32.gmra.mxu0 %v829
    %v897 = vpop.f32.mrf.mxu0
    %v898 = vadd.f32 0.0, %v897
    %v899 = vpop.f32.mrf.mxu0
    %900 = vdwg.mxu0
    %v902 = vrot.slane %v898, 2
    %v904 = vadd.f32 %v111, %v902
    %v905 = vxor.u32 %v904, 2147483648
    %v906 = vmul.f32 %v905, 1.442695
    %v907 = vpow.pop %v906
    %v908 = vadd.f32 %v907, 1.0
    %v909 = vrcp.pop %v908
    %v910 = vmul.f32 1.0, %v909
    %v911 = vtanh.pop %v904
    %v913 = vrot.slane %v810, 7
    %v915 = vmul.f32 %v910, %v913
    %917 = vrot.lane.b32.xlu0 %v911, 64
    %v918 = vpop.permute.xlu0 %917
    %v920 = vmul.f32 %v910, %v918
    %922 = vrot.lane.b32.xlu0 %v920, 32
    %v923 = vpop.permute.xlu0 %922
    %v925 = vadd.f32 %v915, %v923
    %v926 = vtanh.pop %v925
    %928 = vrot.lane.b32.xlu0 %v926, 64
    %v929 = vpop.permute.xlu0 %928
    %v931 = vmul.f32 %v910, %v929
    %v932 = vlaneseq
    %v933 = vshrl.u32 %v932, 7
    %v934 = vsub.s32 6, %v933
    %v935 = vrot.slane %v931, %v934
    %v936 = vmul.f32 %v350, %v935
    %v937 = vadd.f32 %v822, %v936
    %v938 = vmul.f32 %v341, %v935
    %v939 = vadd.f32 %v824, %v938
    %v941 = vrot.slane %v931, 6
    %942 = vrot.lane.b32.xlu0 %v941, 32
    %v943 = vpop.permute.xlu0 %942
    %v944 = vsel %vm120, %v943, 0
    %946 = vmatprep.subr.mxu0 0.0
    %947 = vmatpush1.msra.mxu0 0.0
    %948 = vmatprep.subr.mxu0 0.0
    %949 = vmatpush1.msra.mxu0 0.0
    %950 = vmatprep.subr.mxu0 0.0
    %951 = vmatpush1.msra.mxu0 0.0
    %952 = vmatprep.subr.mxu0 0.0
    %953 = vmatpush1.msra.mxu0 0.0
    %954 = vmatprep.subr.mxu0 0.0
    %955 = vmatpush1.msra.mxu0 0.0
    %956 = vmatprep.subr.mxu0 0.0
    %957 = vmatpush1.msra.mxu0 0.0
    %958 = vmatprep.subr.mxu0 0.0
    %959 = vmatpush1.msra.mxu0 0.0
    %960 = vmatprep.subr.mxu0 0.0
    %961 = vmatpush1.msra.mxu0 0.0
    %962 = vmatprep.subr.mxu0 0.0
    %963 = vmatpush1.msra.mxu0 0.0
    %964 = vmatprep.subr.mxu0 0.0
    %965 = vmatpush1.msra.mxu0 0.0
    %966 = vmatprep.subr.mxu0 0.0
    %967 = vmatpush1.msra.mxu0 0.0
    %968 = vmatprep.subr.mxu0 0.0
    %969 = vmatpush1.msra.mxu0 0.0
    %970 = vmatprep.subr.mxu0 0.0
    %971 = vmatpush1.msra.mxu0 %v117
    %972 = vmatprep.subr.mxu0 0.0
    %973 = vmatpush1.msra.mxu0 %v116
    %974 = vmatprep.subr.mxu0 0.0
    %975 = vmatpush1.msra.mxu0 %v115
    %976 = vmatprep.subr.mxu0 0.0
    %977 = vmatpush1.msra.mxu0 %v114
    %978 = vmatprep.subr.mxu0 0.0
    %979 = vmatpush2.msra.mxu0 0.0
    %980 = vmatprep.subr.mxu0 0.0
    %981 = vmatpush2.msra.mxu0 0.0
    %982 = vmatprep.subr.mxu0 0.0
    %983 = vmatpush2.msra.mxu0 0.0
    %984 = vmatprep.subr.mxu0 0.0
    %985 = vmatpush2.msra.mxu0 0.0
    %986 = vmatprep.subr.mxu0 0.0
    %987 = vmatpush2.msra.mxu0 0.0
    %988 = vmatprep.subr.mxu0 0.0
    %989 = vmatpush2.msra.mxu0 0.0
    %990 = vmatprep.subr.mxu0 0.0
    %991 = vmatpush2.msra.mxu0 0.0
    %992 = vmatprep.subr.mxu0 0.0
    %993 = vmatpush2.msra.mxu0 0.0
    %994 = vmatprep.subr.mxu0 0.0
    %995 = vmatpush2.msra.mxu0 0.0
    %996 = vmatprep.subr.mxu0 0.0
    %997 = vmatpush2.msra.mxu0 0.0
    %998 = vmatprep.subr.mxu0 0.0
    %999 = vmatpush2.msra.mxu0 0.0
    %1000 = vmatprep.subr.mxu0 0.0
    %1001 = vmatpush2.msra.mxu0 0.0
    %1002 = vmatprep.subr.mxu0 0.0
    %1003 = vmatpush2.msra.mxu0 0.0
    %1004 = vmatprep.subr.mxu0 0.0
    %1005 = vmatpush2.msra.mxu0 0.0
    %1006 = vmatprep.subr.mxu0 0.0
    %1007 = vmatpush2.msra.mxu0 0.0
    %1008 = vmatprep.subr.mxu0 0.0
    %1009 = vmatpush2.msra.mxu0 0.0
    %1010 = vmatprep.mubr.f32.mxu0 0.0
    %1011 = vmatmul.mubr.f32.gmra.mxu0 %v944
    %v1012 = vpop.f32.mrf.mxu0
    %v1013 = vadd.f32 0.0, %v1012
    %v1014 = vpop.f32.mrf.mxu0
    %1015 = vdwg.mxu0
    %v1017 = vrot.slane %v1013, 1
    %v1019 = vadd.f32 %v111, %v1017
    %v1020 = vxor.u32 %v1019, 2147483648
    %v1021 = vmul.f32 %v1020, 1.442695
    %v1022 = vpow.pop %v1021
    %v1023 = vadd.f32 %v1022, 1.0
    %v1024 = vrcp.pop %v1023
    %v1025 = vmul.f32 1.0, %v1024
    %v1026 = vtanh.pop %v1019
    %v1028 = vrot.slane %v925, 7
    %v1030 = vmul.f32 %v1025, %v1028
    %1032 = vrot.lane.b32.xlu0 %v1026, 64
    %v1033 = vpop.permute.xlu0 %1032
    %v1035 = vmul.f32 %v1025, %v1033
    %1037 = vrot.lane.b32.xlu0 %v1035, 32
    %v1038 = vpop.permute.xlu0 %1037
    %v1040 = vadd.f32 %v1030, %v1038
    %v1041 = vtanh.pop %v1040
    %1043 = vrot.lane.b32.xlu0 %v1041, 64
    %v1044 = vpop.permute.xlu0 %1043
    %v1046 = vmul.f32 %v1025, %v1044
    %v1047 = vlaneseq
    %v1048 = vshrl.u32 %v1047, 7
    %v1049 = vsub.s32 7, %v1048
    %v1050 = vrot.slane %v1046, %v1049
    %v1051 = vmul.f32 %v230, %v1050
    %v1052 = vadd.f32 %v937, %v1051
    %v1053 = vmul.f32 %v221, %v1050
    %v1054 = vadd.f32 %v939, %v1053
    %v1055 = vld [vmem:[%s3] sm:$0xff]
    %v1056 = vld [vmem:[%s3 + $0x8] sm:$0xff]
    %v1057 = vld [vmem:[%s3 + $0x10] sm:$0xff]
    %v1058 = vld [vmem:[%s3 + $0x18] sm:$0xff]
    %1060 = vrot.lane.b32.xlu0 %v1054, 16
    %v1061 = vpop.permute.xlu0 %1060
    %vm1062 = vcmask 130048
    %v1063 = vsel %vm1062, %v1061, 0
    %1065 = vmatprep.subr.mxu0 0.0
    %1066 = vmatpush1.msra.mxu0 0.0
    %1067 = vmatprep.subr.mxu0 0.0
    %1068 = vmatpush1.msra.mxu0 0.0
    %1069 = vmatprep.subr.mxu0 0.0
    %1070 = vmatpush1.msra.mxu0 0.0
    %1071 = vmatprep.subr.mxu0 0.0
    %1072 = vmatpush1.msra.mxu0 0.0
    %1073 = vmatprep.subr.mxu0 0.0
    %1074 = vmatpush1.msra.mxu0 0.0
    %1075 = vmatprep.subr.mxu0 0.0
    %1076 = vmatpush1.msra.mxu0 0.0
    %1077 = vmatprep.subr.mxu0 0.0
    %1078 = vmatpush1.msra.mxu0 0.0
    %1079 = vmatprep.subr.mxu0 0.0
    %1080 = vmatpush1.msra.mxu0 0.0
    %1081 = vmatprep.subr.mxu0 0.0
    %1082 = vmatpush1.msra.mxu0 0.0
    %1083 = vmatprep.subr.mxu0 0.0
    %1084 = vmatpush1.msra.mxu0 0.0
    %1085 = vmatprep.subr.mxu0 0.0
    %1086 = vmatpush1.msra.mxu0 0.0
    %1087 = vmatprep.subr.mxu0 0.0
    %1088 = vmatpush1.msra.mxu0 0.0
    %1089 = vmatprep.subr.mxu0 0.0
    %1090 = vmatpush1.msra.mxu0 0.0
    %1091 = vmatprep.subr.mxu0 0.0
    %1092 = vmatpush1.msra.mxu0 0.0
    %1093 = vmatprep.subr.mxu0 0.0
    %1094 = vmatpush1.msra.mxu0 %v1058
    %1095 = vmatprep.subr.mxu0 0.0
    %1096 = vmatpush1.msra.mxu0 %v1057
    %1097 = vmatprep.subr.mxu0 0.0
    %1098 = vmatpush2.msra.mxu0 0.0
    %1099 = vmatprep.subr.mxu0 0.0
    %1100 = vmatpush2.msra.mxu0 0.0
    %1101 = vmatprep.subr.mxu0 0.0
    %1102 = vmatpush2.msra.mxu0 0.0
    %1103 = vmatprep.subr.mxu0 0.0
    %1104 = vmatpush2.msra.mxu0 0.0
    %1105 = vmatprep.subr.mxu0 0.0
    %1106 = vmatpush2.msra.mxu0 0.0
    %1107 = vmatprep.subr.mxu0 0.0
    %1108 = vmatpush2.msra.mxu0 0.0
    %1109 = vmatprep.subr.mxu0 0.0
    %1110 = vmatpush2.msra.mxu0 0.0
    %1111 = vmatprep.subr.mxu0 0.0
    %1112 = vmatpush2.msra.mxu0 0.0
    %1113 = vmatprep.subr.mxu0 0.0
    %1114 = vmatpush2.msra.mxu0 0.0
    %1115 = vmatprep.subr.mxu0 0.0
    %1116 = vmatpush2.msra.mxu0 0.0
    %1117 = vmatprep.subr.mxu0 0.0
    %1118 = vmatpush2.msra.mxu0 0.0
    %1119 = vmatprep.subr.mxu0 0.0
    %1120 = vmatpush2.msra.mxu0 0.0
    %1121 = vmatprep.subr.mxu0 0.0
    %1122 = vmatpush2.msra.mxu0 0.0
    %1123 = vmatprep.subr.mxu0 0.0
    %1124 = vmatpush2.msra.mxu0 0.0
    %1125 = vmatprep.subr.mxu0 0.0
    %1126 = vmatpush2.msra.mxu0 0.0
    %1127 = vmatprep.subr.mxu0 0.0
    %1128 = vmatpush2.msra.mxu0 0.0
    %1129 = vmatprep.mubr.f32.mxu0 0.0
    %1130 = vmatmul.mubr.f32.gmra.mxu0 %v1063
    %v1131 = vpop.f32.mrf.mxu0
    %v1132 = vadd.f32 0.0, %v1131
    %v1133 = vpop.f32.mrf.mxu0
    %1134 = vdwg.mxu0
    %1136 = vrot.lane.b32.xlu0 %v1052, 32
    %v1137 = vpop.permute.xlu0 %1136
    %v1138 = vsel %vm1062, %v1137, 0
    %1140 = vmatprep.subr.mxu0 0.0
    %1141 = vmatpush1.msra.mxu0 0.0
    %1142 = vmatprep.subr.mxu0 0.0
    %1143 = vmatpush1.msra.mxu0 0.0
    %1144 = vmatprep.subr.mxu0 0.0
    %1145 = vmatpush1.msra.mxu0 0.0
    %1146 = vmatprep.subr.mxu0 0.0
    %1147 = vmatpush1.msra.mxu0 0.0
    %1148 = vmatprep.subr.mxu0 0.0
    %1149 = vmatpush1.msra.mxu0 0.0
    %1150 = vmatprep.subr.mxu0 0.0
    %1151 = vmatpush1.msra.mxu0 0.0
    %1152 = vmatprep.subr.mxu0 0.0
    %1153 = vmatpush1.msra.mxu0 0.0
    %1154 = vmatprep.subr.mxu0 0.0
    %1155 = vmatpush1.msra.mxu0 0.0
    %1156 = vmatprep.subr.mxu0 0.0
    %1157 = vmatpush1.msra.mxu0 0.0
    %1158 = vmatprep.subr.mxu0 0.0
    %1159 = vmatpush1.msra.mxu0 0.0
    %1160 = vmatprep.subr.mxu0 0.0
    %1161 = vmatpush1.msra.mxu0 0.0
    %1162 = vmatprep.subr.mxu0 0.0
    %1163 = vmatpush1.msra.mxu0 0.0
    %1164 = vmatprep.subr.mxu0 0.0
    %1165 = vmatpush1.msra.mxu0 0.0
    %1166 = vmatprep.subr.mxu0 0.0
    %1167 = vmatpush1.msra.mxu0 0.0
    %1168 = vmatprep.subr.mxu0 0.0
    %1169 = vmatpush1.msra.mxu0 %v1056
    %1170 = vmatprep.subr.mxu0 0.0
    %1171 = vmatpush1.msra.mxu0 %v1055
    %1172 = vmatprep.subr.mxu0 0.0
    %1173 = vmatpush2.msra.mxu0 0.0
    %1174 = vmatprep.subr.mxu0 0.0
    %1175 = vmatpush2.msra.mxu0 0.0
    %1176 = vmatprep.subr.mxu0 0.0
    %1177 = vmatpush2.msra.mxu0 0.0
    %1178 = vmatprep.subr.mxu0 0.0
    %1179 = vmatpush2.msra.mxu0 0.0
    %1180 = vmatprep.subr.mxu0 0.0
    %1181 = vmatpush2.msra.mxu0 0.0
    %1182 = vmatprep.subr.mxu0 0.0
    %1183 = vmatpush2.msra.mxu0 0.0
    %1184 = vmatprep.subr.mxu0 0.0
    %1185 = vmatpush2.msra.mxu0 0.0
    %1186 = vmatprep.subr.mxu0 0.0
    %1187 = vmatpush2.msra.mxu0 0.0
    %1188 = vmatprep.subr.mxu0 0.0
    %1189 = vmatpush2.msra.mxu0 0.0
    %1190 = vmatprep.subr.mxu0 0.0
    %1191 = vmatpush2.msra.mxu0 0.0
    %1192 = vmatprep.subr.mxu0 0.0
    %1193 = vmatpush2.msra.mxu0 0.0
    %1194 = vmatprep.subr.mxu0 0.0
    %1195 = vmatpush2.msra.mxu0 0.0
    %1196 = vmatprep.subr.mxu0 0.0
    %1197 = vmatpush2.msra.mxu0 0.0
    %1198 = vmatprep.subr.mxu0 0.0
    %1199 = vmatpush2.msra.mxu0 0.0
    %1200 = vmatprep.subr.mxu0 0.0
    %1201 = vmatpush2.msra.mxu0 0.0
    %1202 = vmatprep.subr.mxu0 0.0
    %1203 = vmatpush2.msra.mxu0 0.0
    %1204 = vmatprep.mubr.f32.mxu0 0.0
    %1205 = vmatmul.mubr.f32.gmra.mxu0 %v1138
    %v1206 = vpop.f32.mrf.mxu0
    %v1207 = vadd.f32 %v1132, %v1206
    %v1208 = vpop.f32.mrf.mxu0
    %1209 = vdwg.mxu0
    %v1210 = vlaneseq
    %v1211 = vshrl.u32 %v1210, 7
    %v1212 = vsub.s32 3, %v1211
    %v1213 = vrot.slane %v26, %v1212
    %v1214 = vadd.f32 %v1207, %v1213
    %1215 = vst [vmem:[#allocation2] sm:$0xff] %v1214
    %v1216 = vlaneseq
    %v1217 = vand.u32 %v1216, 127
    %v1218 = vcvt.s32.f32 %v1217
    %v1219 = vcvt.s32.f32 %v119
    %vm1220 = vcmp.eq.s32.totalorder %v119, %v1217
    %v1221 = vsel %vm1220, 1, 0
    %v1222 = vcvt.s32.f32 %v1221
    %v1223 = vld [vmem:[%s4] sm:$0x1f]
    %vm1224 = vcmp.eq.f32.partialorder %v1218, 3.0
    %v1225 = vsel %vm1224, 0.0, -10000.0
    %v1226 = vmul.f32 %v1225, %v1222
    %vm1227 = vcmask 36864
    %v1228 = vsel %vm1227, %v1226, 0.0
    %1229 = vadd.xlane.f32.xlu0 %v1228
    %v1230 = vpop.xlane.xlu0 %1229
    %v1231 = vadd.f32 %v1230, %v1223
    %v1232 = vsel %vm1227, %v1231, -inf
    %v1233 = vrot.slane %v1232, 4
    %v1234 = vmax.f32 %v1232, %v1233
    %v1235 = vrot.slane %v1234, 2
    %v1236 = vmax.f32 %v1234, %v1235
    %v1237 = vrot.slane %v1236, 1
    %v1238 = vmax.f32 %v1236, %v1237
    %vm1239 = vcmp.eq.f32.partialorder %v1231, %v1238
    %v1240 = vsel %vm1239, %v1219, 5.0
    %v1241 = vsel %vm1227, %v1240, inf
    %v1242 = vrot.slane %v1241, 4
    %v1243 = vmin.f32 %v1241, %v1242
    %v1244 = vrot.slane %v1243, 2
    %v1245 = vmin.f32 %v1243, %v1244
    %v1246 = vrot.slane %v1245, 1
    %v1247 = vmin.f32 %v1245, %v1246
    %v1248 = vadd.f32 %v1238, %v1214
    %v1249 = vlaneseq
    %v1250 = vshrl.u32 %v1249, 7
    %v1251 = vsub.s32 0, %v1250
    %v1252 = vrot.slane %v1248, %v1251
    %v1253 = vmul.f32 %v1252, %v1222
    %v1254 = vsel %vm1227, %v1253, 0.0
    %1255 = vadd.xlane.f32.xlu0 %v1254
    %v1256 = vpop.xlane.xlu0 %1255
    %v1257 = vadd.f32 %v1256, %v1223
    %v1258 = vsel %vm1227, %v1257, -inf
    %v1259 = vrot.slane %v1258, 4
    %v1260 = vmax.f32 %v1258, %v1259
    %v1261 = vrot.slane %v1260, 2
    %v1262 = vmax.f32 %v1260, %v1261
    %v1263 = vrot.slane %v1262, 1
    %v1264 = vmax.f32 %v1262, %v1263
    %vm1265 = vcmp.eq.f32.partialorder %v1257, %v1264
    %v1266 = vsel %vm1265, %v1219, 5.0
    %v1267 = vsel %vm1227, %v1266, inf
    %v1268 = vrot.slane %v1267, 4
    %v1269 = vmin.f32 %v1267, %v1268
    %v1270 = vrot.slane %v1269, 2
    %v1271 = vmin.f32 %v1269, %v1270
    %v1272 = vrot.slane %v1271, 1
    %v1273 = vmin.f32 %v1271, %v1272
    %v1274 = vadd.f32 %v1264, %v1214
    %v1275 = vlaneseq
    %v1276 = vshrl.u32 %v1275, 7
    %v1277 = vsub.s32 1, %v1276
    %v1278 = vrot.slane %v1274, %v1277
    %v1279 = vmul.f32 %v1278, %v1222
    %v1280 = vsel %vm1227, %v1279, 0.0
    %1281 = vadd.xlane.f32.xlu0 %v1280
    %v1282 = vpop.xlane.xlu0 %1281
    %v1283 = vadd.f32 %v1282, %v1223
    %v1284 = vsel %vm1227, %v1283, -inf
    %v1285 = vrot.slane %v1284, 4
    %v1286 = vmax.f32 %v1284, %v1285
    %v1287 = vrot.slane %v1286, 2
    %v1288 = vmax.f32 %v1286, %v1287
    %v1289 = vrot.slane %v1288, 1
    %v1290 = vmax.f32 %v1288, %v1289
    %vm1291 = vcmp.eq.f32.partialorder %v1283, %v1290
    %v1292 = vsel %vm1291, %v1219, 5.0
    %v1293 = vsel %vm1227, %v1292, inf
    %v1294 = vrot.slane %v1293, 4
    %v1295 = vmin.f32 %v1293, %v1294
    %v1296 = vrot.slane %v1295, 2
    %v1297 = vmin.f32 %v1295, %v1296
    %v1298 = vrot.slane %v1297, 1
    %v1299 = vmin.f32 %v1297, %v1298
    %v1300 = vadd.f32 %v1290, %v1214
    %v1301 = vlaneseq
    %v1302 = vshrl.u32 %v1301, 7
    %v1303 = vsub.s32 2, %v1302
    %v1304 = vrot.slane %v1300, %v1303
    %v1305 = vmul.f32 %v1304, %v1222
    %v1306 = vsel %vm1227, %v1305, 0.0
    %1307 = vadd.xlane.f32.xlu0 %v1306
    %v1308 = vpop.xlane.xlu0 %1307
    %v1309 = vadd.f32 %v1308, %v1223
    %v1310 = vsel %vm1227, %v1309, -inf
    %v1311 = vrot.slane %v1310, 4
    %v1312 = vmax.f32 %v1310, %v1311
    %v1313 = vrot.slane %v1312, 2
    %v1314 = vmax.f32 %v1312, %v1313
    %v1315 = vrot.slane %v1314, 1
    %v1316 = vmax.f32 %v1314, %v1315
    %vm1317 = vcmp.eq.f32.partialorder %v1309, %v1316
    %v1318 = vsel %vm1317, %v1219, 5.0
    %v1319 = vsel %vm1227, %v1318, inf
    %v1320 = vrot.slane %v1319, 4
    %v1321 = vmin.f32 %v1319, %v1320
    %v1322 = vrot.slane %v1321, 2
    %v1323 = vmin.f32 %v1321, %v1322
    %v1324 = vrot.slane %v1323, 1
    %v1325 = vmin.f32 %v1323, %v1324
    %v1326 = vadd.f32 %v1316, %v1214
    %v1327 = vlaneseq
    %v1328 = vshrl.u32 %v1327, 7
    %v1329 = vsub.s32 3, %v1328
    %v1330 = vrot.slane %v1326, %v1329
    %v1331 = vmul.f32 %v1330, %v1222
    %v1332 = vsel %vm1227, %v1331, 0.0
    %1333 = vadd.xlane.f32.xlu0 %v1332
    %v1334 = vpop.xlane.xlu0 %1333
    %v1335 = vadd.f32 %v1334, %v1223
    %v1336 = vsel %vm1227, %v1335, -inf
    %v1337 = vrot.slane %v1336, 4
    %v1338 = vmax.f32 %v1336, %v1337
    %v1339 = vrot.slane %v1338, 2
    %v1340 = vmax.f32 %v1338, %v1339
    %v1341 = vrot.slane %v1340, 1
    %v1342 = vmax.f32 %v1340, %v1341
    %vm1343 = vcmp.eq.f32.partialorder %v1335, %v1342
    %v1344 = vsel %vm1343, %v1219, 5.0
    %v1345 = vsel %vm1227, %v1344, inf
    %v1346 = vrot.slane %v1345, 4
    %v1347 = vmin.f32 %v1345, %v1346
    %v1348 = vrot.slane %v1347, 2
    %v1349 = vmin.f32 %v1347, %v1348
    %v1350 = vrot.slane %v1349, 1
    %v1351 = vmin.f32 %v1349, %v1350
    %v1352 = vadd.f32 %v1342, %v1214
    %v1353 = vlaneseq
    %v1354 = vshrl.u32 %v1353, 7
    %v1355 = vsub.s32 4, %v1354
    %v1356 = vrot.slane %v1352, %v1355
    %v1357 = vmul.f32 %v1356, %v1222
    %v1358 = vsel %vm1227, %v1357, 0.0
    %1359 = vadd.xlane.f32.xlu0 %v1358
    %v1360 = vpop.xlane.xlu0 %1359
    %v1361 = vadd.f32 %v1360, %v1223
    %v1362 = vsel %vm1227, %v1361, -inf
    %v1363 = vrot.slane %v1362, 4
    %v1364 = vmax.f32 %v1362, %v1363
    %v1365 = vrot.slane %v1364, 2
    %v1366 = vmax.f32 %v1364, %v1365
    %v1367 = vrot.slane %v1366, 1
    %v1368 = vmax.f32 %v1366, %v1367
    %vm1369 = vcmp.eq.f32.partialorder %v1361, %v1368
    %v1370 = vsel %vm1369, %v1219, 5.0
    %v1371 = vsel %vm1227, %v1370, inf
    %v1372 = vrot.slane %v1371, 4
    %v1373 = vmin.f32 %v1371, %v1372
    %v1374 = vrot.slane %v1373, 2
    %v1375 = vmin.f32 %v1373, %v1374
    %v1376 = vrot.slane %v1375, 1
    %v1377 = vmin.f32 %v1375, %v1376
    %v1378 = vadd.f32 %v1368, %v1214
    %v1379 = vlaneseq
    %v1380 = vshrl.u32 %v1379, 7
    %v1381 = vsub.s32 5, %v1380
    %v1382 = vrot.slane %v1378, %v1381
    %v1383 = vmul.f32 %v1382, %v1222
    %v1384 = vsel %vm1227, %v1383, 0.0
    %1385 = vadd.xlane.f32.xlu0 %v1384
    %v1386 = vpop.xlane.xlu0 %1385
    %v1387 = vadd.f32 %v1386, %v1223
    %v1388 = vsel %vm1227, %v1387, -inf
    %v1389 = vrot.slane %v1388, 4
    %v1390 = vmax.f32 %v1388, %v1389
    %v1391 = vrot.slane %v1390, 2
    %v1392 = vmax.f32 %v1390, %v1391
    %v1393 = vrot.slane %v1392, 1
    %v1394 = vmax.f32 %v1392, %v1393
    %vm1395 = vcmp.eq.f32.partialorder %v1387, %v1394
    %v1396 = vsel %vm1395, %v1219, 5.0
    %v1397 = vsel %vm1227, %v1396, inf
    %v1398 = vrot.slane %v1397, 4
    %v1399 = vmin.f32 %v1397, %v1398
    %v1400 = vrot.slane %v1399, 2
    %v1401 = vmin.f32 %v1399, %v1400
    %v1402 = vrot.slane %v1401, 1
    %v1403 = vmin.f32 %v1401, %v1402
    %v1404 = vadd.f32 %v1394, %v1214
    %v1405 = vlaneseq
    %v1406 = vshrl.u32 %v1405, 7
    %v1407 = vsub.s32 6, %v1406
    %v1408 = vrot.slane %v1404, %v1407
    %v1409 = vmul.f32 %v1408, %v1222
    %v1410 = vsel %vm1227, %v1409, 0.0
    %1411 = vadd.xlane.f32.xlu0 %v1410
    %v1412 = vpop.xlane.xlu0 %1411
    %v1413 = vadd.f32 %v1412, %v1223
    %v1414 = vsel %vm1227, %v1413, -inf
    %v1415 = vrot.slane %v1414, 4
    %v1416 = vmax.f32 %v1414, %v1415
    %v1417 = vrot.slane %v1416, 2
    %v1418 = vmax.f32 %v1416, %v1417
    %v1419 = vrot.slane %v1418, 1
    %v1420 = vmax.f32 %v1418, %v1419
    %vm1421 = vcmp.eq.f32.partialorder %v1413, %v1420
    %v1422 = vsel %vm1421, %v1219, 5.0
    %v1423 = vsel %vm1227, %v1422, inf
    %v1424 = vrot.slane %v1423, 4
    %v1425 = vmin.f32 %v1423, %v1424
    %v1426 = vrot.slane %v1425, 2
    %v1427 = vmin.f32 %v1425, %v1426
    %v1428 = vrot.slane %v1427, 1
    %v1429 = vmin.f32 %v1427, %v1428
    %v1430 = vadd.f32 %v1420, %v1214
    %v1431 = vrot.slane %v26, 2
    %v1433 = vadd.f32 %v1430, %v1431
    %vm1434 = vcmask 39943
    %v1435 = vsel %vm1434, %v1433, -inf
    %1436 = vmax.xlane.f32.xlu0 %v1435
    %v1437 = vpop.xlane.xlu0 %1436
    %vm1438 = vcmp.eq.f32.partialorder %v1433, %v1437
    %v1439 = vsel %vm1438, %v1218, 5.0
    %v1440 = vsel %vm1434, %v1439, inf
    %1441 = vmin.xlane.f32.xlu0 %v1440
    %v1442 = vpop.xlane.xlu0 %1441
    %vm1443 = vcmp.eq.f32.partialorder %v1218, %v1442
    %v1444 = vsel %vm1443, 1, 0
    %v1445 = vcvt.s32.f32 %v1444
    %v1446 = vmul.f32 %v1445, %v1218
    %v1447 = vsel %vm1434, %v1446, 0.0
    %1448 = vadd.xlane.f32.xlu0 %v1447
    %v1449 = vpop.xlane.xlu0 %1448
    %vm1450 = vcmp.eq.s32.totalorder %v1217, 7
    %v1451 = vsel %vm1450, 1, 0
    %v1452 = vcvt.s32.f32 %v1451
    %v1453 = vmul.f32 %v1452, %v1449
    %v1454 = vadd.f32 %v1453, 0.0
    %v1455 = vmul.f32 %v1445, %v1429
    %v1456 = vsel %vm1434, %v1455, 0.0
    %1457 = vadd.xlane.f32.xlu0 %v1456
    %v1458 = vpop.xlane.xlu0 %1457
    %vm1459 = vcmp.eq.f32.partialorder %v1218, %v1458
    %v1460 = vsel %vm1459, 1, 0
    %v1461 = vcvt.s32.f32 %v1460
    %v1462 = vmul.f32 %v1461, %v1218
    %v1463 = vsel %vm1434, %v1462, 0.0
    %1464 = vadd.xlane.f32.xlu0 %v1463
    %v1465 = vpop.xlane.xlu0 %1464
    %vm1466 = vcmp.eq.s32.totalorder %v1217, 6
    %v1467 = vsel %vm1466, 1, 0
    %v1468 = vcvt.s32.f32 %v1467
    %v1469 = vmul.f32 %v1468, %v1465
    %v1470 = vadd.f32 %v1454, %v1469
    %v1471 = vmul.f32 %v1461, %v1403
    %v1472 = vsel %vm1434, %v1471, 0.0
    %1473 = vadd.xlane.f32.xlu0 %v1472
    %v1474 = vpop.xlane.xlu0 %1473
    %vm1475 = vcmp.eq.f32.partialorder %v1218, %v1474
    %v1476 = vsel %vm1475, 1, 0
    %v1477 = vcvt.s32.f32 %v1476
    %v1478 = vmul.f32 %v1477, %v1218
    %v1479 = vsel %vm1434, %v1478, 0.0
    %1480 = vadd.xlane.f32.xlu0 %v1479
    %v1481 = vpop.xlane.xlu0 %1480
    %vm1482 = vcmp.eq.s32.totalorder %v1217, 5
    %v1483 = vsel %vm1482, 1, 0
    %v1484 = vcvt.s32.f32 %v1483
    %v1485 = vmul.f32 %v1484, %v1481
    %v1486 = vadd.f32 %v1470, %v1485
    %v1487 = vmul.f32 %v1477, %v1377
    %v1488 = vsel %vm1434, %v1487, 0.0
    %1489 = vadd.xlane.f32.xlu0 %v1488
    %v1490 = vpop.xlane.xlu0 %1489
    %vm1491 = vcmp.eq.f32.partialorder %v1218, %v1490
    %v1492 = vsel %vm1491, 1, 0
    %v1493 = vcvt.s32.f32 %v1492
    %v1494 = vmul.f32 %v1493, %v1218
    %v1495 = vsel %vm1434, %v1494, 0.0
    %1496 = vadd.xlane.f32.xlu0 %v1495
    %v1497 = vpop.xlane.xlu0 %1496
    %vm1498 = vcmp.eq.s32.totalorder %v1217, 4
    %v1499 = vsel %vm1498, 1, 0
    %v1500 = vcvt.s32.f32 %v1499
    %v1501 = vmul.f32 %v1500, %v1497
    %v1502 = vadd.f32 %v1486, %v1501
    %v1503 = vmul.f32 %v1493, %v1351
    %v1504 = vsel %vm1434, %v1503, 0.0
    %1505 = vadd.xlane.f32.xlu0 %v1504
    %v1506 = vpop.xlane.xlu0 %1505
    %vm1507 = vcmp.eq.f32.partialorder %v1218, %v1506
    %v1508 = vsel %vm1507, 1, 0
    %v1509 = vcvt.s32.f32 %v1508
    %v1510 = vmul.f32 %v1509, %v1218
    %v1511 = vsel %vm1434, %v1510, 0.0
    %1512 = vadd.xlane.f32.xlu0 %v1511
    %v1513 = vpop.xlane.xlu0 %1512
    %vm1514 = vcmp.eq.s32.totalorder %v1217, 3
    %v1515 = vsel %vm1514, 1, 0
    %v1516 = vcvt.s32.f32 %v1515
    %v1517 = vmul.f32 %v1516, %v1513
    %v1518 = vadd.f32 %v1502, %v1517
    %v1519 = vmul.f32 %v1509, %v1325
    %v1520 = vsel %vm1434, %v1519, 0.0
    %1521 = vadd.xlane.f32.xlu0 %v1520
    %v1522 = vpop.xlane.xlu0 %1521
    %vm1523 = vcmp.eq.f32.partialorder %v1218, %v1522
    %v1524 = vsel %vm1523, 1, 0
    %v1525 = vcvt.s32.f32 %v1524
    %v1526 = vmul.f32 %v1525, %v1218
    %v1527 = vsel %vm1434, %v1526, 0.0
    %1528 = vadd.xlane.f32.xlu0 %v1527
    %v1529 = vpop.xlane.xlu0 %1528
    %vm1530 = vcmp.eq.s32.totalorder %v1217, 2
    %v1531 = vsel %vm1530, 1, 0
    %v1532 = vcvt.s32.f32 %v1531
    %v1533 = vmul.f32 %v1532, %v1529
    %v1534 = vadd.f32 %v1518, %v1533
    %v1535 = vmul.f32 %v1525, %v1299
    %v1536 = vsel %vm1434, %v1535, 0.0
    %1537 = vadd.xlane.f32.xlu0 %v1536
    %v1538 = vpop.xlane.xlu0 %1537
    %vm1539 = vcmp.eq.f32.partialorder %v1218, %v1538
    %v1540 = vsel %vm1539, 1, 0
    %v1541 = vcvt.s32.f32 %v1540
    %v1542 = vmul.f32 %v1541, %v1218
    %v1543 = vsel %vm1434, %v1542, 0.0
    %1544 = vadd.xlane.f32.xlu0 %v1543
    %v1545 = vpop.xlane.xlu0 %1544
    %vm1546 = vcmp.eq.s32.totalorder %v1217, 1
    %v1547 = vsel %vm1546, 1, 0
    %v1548 = vcvt.s32.f32 %v1547
    %v1549 = vmul.f32 %v1548, %v1545
    %v1550 = vadd.f32 %v1534, %v1549
    %v1551 = vmul.f32 %v1541, %v1273
    %v1552 = vsel %vm1434, %v1551, 0.0
    %1553 = vadd.xlane.f32.xlu0 %v1552
    %v1554 = vpop.xlane.xlu0 %1553
    %vm1555 = vcmp.eq.f32.partialorder %v1218, %v1554
    %v1556 = vsel %vm1555, 1, 0
    %v1557 = vcvt.s32.f32 %v1556
    %v1558 = vmul.f32 %v1557, %v1218
    %v1559 = vsel %vm1434, %v1558, 0.0
    %1560 = vadd.xlane.f32.xlu0 %v1559
    %v1561 = vpop.xlane.xlu0 %1560
    %vm1562 = vcmp.eq.s32.totalorder %v1217, 0
    %v1563 = vsel %vm1562, 1, 0
    %v1564 = vcvt.s32.f32 %v1563
    %v1565 = vmul.f32 %v1564, %v1561
    %v1566 = vadd.f32 %v1550, %v1565
    %v1567 = vmul.f32 %v1557, %v1247
    %v1568 = vsel %vm1434, %v1567, 0.0
    %1569 = vadd.xlane.f32.xlu0 %v1568
    %v1570 = vpop.xlane.xlu0 %1569
    %vm1571 = vcmp.eq.f32.partialorder %v1218, %v1570
    %v1572 = vsel %vm1571, 1, 0
    %v1573 = vcvt.s32.f32 %v1572
    %v1574 = vmul.f32 %v1573, %v1218
    %v1575 = vsel %vm1434, %v1574, 0.0
    %1576 = vadd.xlane.f32.xlu0 %v1575
    %v1577 = vpop.xlane.xlu0 %1576
    %vm1578 = vcmp.eq.s32.totalorder %v1217, 8
    %v1579 = vsel %vm1578, 1, 0
    %v1580 = vcvt.s32.f32 %v1579
    %v1581 = vmul.f32 %v1580, %v1437
    %v1582 = vadd.f32 %v1566, %v1581
    %vm1583 = vcmp.eq.s32.totalorder %v1217, 9
    %v1584 = vsel %vm1583, 1, 0
    %v1585 = vcvt.s32.f32 %v1584
    %v1586 = vmul.f32 %v1585, %v1577
    %v1587 = vadd.f32 %v1582, %v1586
    %1588 = vst [vmem:[%s7 - $0x7] sm:$0x80] %v1587
    // Predicated region
    $region26: #{_bilstm_crf_forward.1} parent=1 // pred_check
      _
    $region27: #{_bilstm_crf_forward.1} parent=1 // pred_check_branch
      %1590 = sbr.rel (0) target = $region29
    $region28: #{_bilstm_crf_forward.1} parent=1 // pred_region
      %s1592 = ssub.s32 128, 128
      %1593 = vsyncadd [#allocation3], %s1592
      %s1595 = sshll.u32 [#allocation2], 4
      %s1596 = int_to_ptr.vmem [resolvable:$true] %s1595
      %1598 = dma.vmem_to_hbm [thread:$0]  %s1596, 128, %s6, [#allocation3]
    $region29: #{_bilstm_crf_forward.1} parent=1 // pred_fallthru
      _
    // Predicated region
    $region30: #{_bilstm_crf_forward.1} parent=1 // pred_check
      _
    $region31: #{_bilstm_crf_forward.1} parent=1 // pred_check_branch
      %1600 = sbr.rel (0) target = $region33
    $region32: #{_bilstm_crf_forward.1} parent=1 // pred_region
      _
    $region33: #{_bilstm_crf_forward.1} parent=1 // pred_fallthru
      _
    // Predicated region
    $region34: #{_bilstm_crf_forward.1} parent=1 // pred_check
      _
    $region35: #{_bilstm_crf_forward.1} parent=1 // pred_check_branch
      %1602 = sbr.rel (0) target = $region37
    $region36: #{_bilstm_crf_forward.1} parent=1 // pred_region
      %1603 = dma.done [#allocation3], 128
    $region37: #{_bilstm_crf_forward.1} parent=1 // pred_fallthru
      _
    // Predicated region
    $region38: #{_bilstm_crf_forward.1} parent=1 // pred_check
      _
    $region39: #{_bilstm_crf_forward.1} parent=1 // pred_check_branch
      %1605 = sbr.rel (0) target = $region41
    $region40: #{_bilstm_crf_forward.1} parent=1 // pred_region
      _
    $region41: #{_bilstm_crf_forward.1} parent=1 // pred_fallthru
      _
    %1606 = vsyncpa [#allocation3], 1

</llo_original>
